<compile_context>
chip_gen: v5e
topology: v5e:2x2
jax: 0.10.0
libtpu: 0.0.40
codegen_flags: <defaults>
</compile_context>

<pallas_src>
import functools

import jax
import jax.numpy as jnp
from jax import lax
from jax.experimental import pallas as pl
from jax.experimental.pallas import tpu as pltpu

TM = 512                      # voxel (lane) tile per grid step
VMEM_LIMIT = 32 * 1024 * 1024  # explicit scoped-VMEM budget (fits all gens)


# ---------------------------------------------------------------------------
# Pallas kernels
# ---------------------------------------------------------------------------
def _convT_stats_kernel(w_ref, a_ref, y_ref, sum_ref, ssq_ref):
    """y^T tile = W (Cout, K) @ A^T (K, TM) on the MXU (bf16 in, f32 acc),
    plus per-tile per-channel sum / sum-of-squares partials for training BN."""
    y = jnp.dot(w_ref[...], a_ref[...], preferred_element_type=jnp.float32)
    y_ref[...] = y
    # Per-tile partials (reduced over the voxel/lane axis).  Written once per
    # grid step -> the grid axis stays "parallel" (megacore friendly).
    sum_ref[...] = jnp.sum(y, axis=1, keepdims=True)[None]
    ssq_ref[...] = jnp.sum(y * y, axis=1, keepdims=True)[None]


def _bn_relu_kernel(y_ref, scale_ref, shift_ref, o_ref):
    o_ref[...] = jnp.maximum(y_ref[...] * scale_ref[...] + shift_ref[...], 0.0)


def _bn_add_relu_kernel(y_ref, scale_ref, shift_ref, res_ref, o_ref):
    o_ref[...] = jnp.maximum(
        y_ref[...] * scale_ref[...] + shift_ref[...] + res_ref[...], 0.0)


# ---------------------------------------------------------------------------
# Pallas wrappers
# ---------------------------------------------------------------------------
def convT_matmul_with_stats(w_mat, a_t):
    """w_mat: (Cout, K) bf16, a_t: (K, Mp) bf16 (Mp % TM == 0).
    Returns y^T (Cout, Mp) f32 and per-tile partial sums / ssq, each
    (n_tiles, Cout, 1) f32."""
    cout, k = w_mat.shape
    mp = a_t.shape[1]
    n_tiles = mp // TM
    return pl.pallas_call(
        _convT_stats_kernel,
        out_shape=(jax.ShapeDtypeStruct((cout, mp), jnp.float32),
                   jax.ShapeDtypeStruct((n_tiles, cout, 1), jnp.float32),
                   jax.ShapeDtypeStruct((n_tiles, cout, 1), jnp.float32)),
        grid_spec=pltpu.PrefetchScalarGridSpec(
            num_scalar_prefetch=0,
            grid=(n_tiles,),
            in_specs=[pl.BlockSpec((cout, k), lambda i: (0, 0)),   # resident W
                      pl.BlockSpec((k, TM), lambda i: (0, i))],
            out_specs=(pl.BlockSpec((cout, TM), lambda i: (0, i)),
                       pl.BlockSpec((1, cout, 1), lambda i: (i, 0, 0)),
                       pl.BlockSpec((1, cout, 1), lambda i: (i, 0, 0)))),
        compiler_params=pltpu.CompilerParams(
            dimension_semantics=("parallel",),
            vmem_limit_bytes=VMEM_LIMIT),
    )(w_mat, a_t)


def bn_relu(y_t, scale, shift):
    """y_t: (C, Mp) f32, scale/shift: (C, 1) f32. In-place (aliased) output."""
    c, mp = y_t.shape
    return pl.pallas_call(
        _bn_relu_kernel,
        out_shape=jax.ShapeDtypeStruct((c, mp), jnp.float32),
        grid_spec=pltpu.PrefetchScalarGridSpec(
            num_scalar_prefetch=0,
            grid=(mp // TM,),
            in_specs=[pl.BlockSpec((c, TM), lambda i: (0, i)),
                      pl.BlockSpec((c, 1), lambda i: (0, 0)),
                      pl.BlockSpec((c, 1), lambda i: (0, 0))],
            out_specs=pl.BlockSpec((c, TM), lambda i: (0, i))),
        input_output_aliases={0: 0},
        compiler_params=pltpu.CompilerParams(
            dimension_semantics=("parallel",),
            vmem_limit_bytes=VMEM_LIMIT),
    )(y_t, scale, shift)


def bn_add_relu(y_t, scale, shift, residual_t):
    c, mp = y_t.shape
    return pl.pallas_call(
        _bn_add_relu_kernel,
        out_shape=jax.ShapeDtypeStruct((c, mp), jnp.float32),
        grid_spec=pltpu.PrefetchScalarGridSpec(
            num_scalar_prefetch=0,
            grid=(mp // TM,),
            in_specs=[pl.BlockSpec((c, TM), lambda i: (0, i)),
                      pl.BlockSpec((c, 1), lambda i: (0, 0)),
                      pl.BlockSpec((c, 1), lambda i: (0, 0)),
                      pl.BlockSpec((c, TM), lambda i: (0, i))],
            out_specs=pl.BlockSpec((c, TM), lambda i: (0, i))),
        input_output_aliases={0: 0},
        compiler_params=pltpu.CompilerParams(
            dimension_semantics=("parallel",),
            vmem_limit_bytes=VMEM_LIMIT),
    )(y_t, scale, shift, residual_t)


# ---------------------------------------------------------------------------
# Glue: layout plumbing, im2col (transposed), BN stat folding
# ---------------------------------------------------------------------------
def _pad_cols(a, tm=TM):
    m = a.shape[-1]
    mp = pl.cdiv(m, tm) * tm
    if mp != m:
        a = jnp.pad(a, ((0, 0), (0, mp - m)))
    return a, m


def _im2col_T(x, stride=1):
    """x: (C, N, D, H, W) -> A^T of shape (27*C, N*Do*Ho*Wo), padding=1.
    Rows are tap-major then channel (matches weight.reshape(27*C, Cout))."""
    c, n, d, h, w = x.shape
    xp = jnp.pad(x, ((0, 0), (0, 0), (1, 1), (1, 1), (1, 1)))
    do = (d - 1) // stride + 1
    ho = (h - 1) // stride + 1
    wo = (w - 1) // stride + 1
    taps = []
    for kd in range(3):
        for kh in range(3):
            for kw in range(3):
                taps.append(xp[:, :,
                               kd:kd + (do - 1) * stride + 1:stride,
                               kh:kh + (ho - 1) * stride + 1:stride,
                               kw:kw + (wo - 1) * stride + 1:stride])
    a = jnp.stack(taps, axis=0)               # (27, C, N, Do, Ho, Wo)
    return a.reshape(27 * c, n * do * ho * wo), (do, ho, wo)


def _bn_scale_shift(sum_partials, ssq_partials, m_true, gamma, beta, eps):
    """Fold per-tile partials into BN(train) per-channel scale/shift (C, 1)."""
    s = jnp.sum(sum_partials, axis=0)[:, 0]    # (C,)
    ss = jnp.sum(ssq_partials, axis=0)[:, 0]
    mean = s / m_true
    var = jnp.maximum(ss / m_true - mean * mean, 0.0)   # biased (train BN)
    scale = gamma / jnp.sqrt(var + eps)
    shift = beta - mean * scale
    return scale[:, None], shift[:, None]


# ---------------------------------------------------------------------------
# BasicBlock forward (downsample=None -> identity residual, stride must be 1)
# ---------------------------------------------------------------------------
@functools.partial(jax.jit, static_argnames=("stride",))
def basic_block_forward(x_ncdhw, params, stride=1, eps=1e-5):
    if stride != 1:
        raise NotImplementedError(
            "stride != 1 requires a downsample branch (downsample is None).")

    x = x_ncdhw.astype(jnp.float32)
    n, cin, d, h, w = x.shape
    planes = params["w1"].shape[-1]
    x_cm = jnp.transpose(x, (1, 0, 2, 3, 4))            # (C, N, D, H, W)

    # --- stage 1: conv3x3x3 -> BN(train) -> ReLU -------------------------
    a1, (do, ho, wo) = _im2col_T(x_cm.astype(jnp.bfloat16), stride)
    m1 = n * do * ho * wo
    a1p, _ = _pad_cols(a1)
    w1m = params["w1"].reshape(27 * cin, planes).T.astype(jnp.bfloat16)
    y1, s1, ss1 = convT_matmul_with_stats(w1m, a1p)
    sc1, sh1 = _bn_scale_shift(s1, ss1, m1, params["g1"], params["b1"], eps)
    h1 = bn_relu(y1, sc1, sh1)                          # (planes, Mp1)

    # --- stage 2: conv3x3x3 (stride 1) -> BN(train) ----------------------
    h1_cm = h1[:, :m1].reshape(planes, n, do, ho, wo).astype(jnp.bfloat16)
    a2, _ = _im2col_T(h1_cm, 1)
    m2 = m1
    a2p, _ = _pad_cols(a2)
    w2m = params["w2"].reshape(27 * planes, planes).T.astype(jnp.bfloat16)
    y2, s2, ss2 = convT_matmul_with_stats(w2m, a2p)
    sc2, sh2 = _bn_scale_shift(s2, ss2, m2, params["g2"], params["b2"], eps)

    # --- identity residual add + ReLU ------------------------------------
    res, _ = _pad_cols(x_cm.reshape(cin, n * d * h * w))
    out = bn_add_relu(y2, sc2, sh2, res)                # (planes, Mp2)
    out = out[:, :m2].reshape(planes, n, do, ho, wo)
    return jnp.transpose(out, (1, 0, 2, 3, 4))          # back to NCDHW


# ---------------------------------------------------------------------------
# Deterministic parameter init + pure-JAX reference (f32, HIGHEST precision)
# ---------------------------------------------------------------------------
def init_params(key, in_planes, planes):
    ks = jax.random.split(key, 6)
    rnd = lambda k, s: (0.1 * jax.random.normal(k, s)).astype(jnp.float32)
    return {
        "w1": rnd(ks[0], (3, 3, 3, in_planes, planes)),   # (kd,kh,kw,I,O)
        "w2": rnd(ks[1], (3, 3, 3, planes, planes)),
        "g1": 1.0 + rnd(ks[2], (planes,)), "b1": rnd(ks[3], (planes,)),
        "g2": 1.0 + rnd(ks[4], (planes,)), "b2": rnd(ks[5], (planes,)),
    }


def ref_forward(x, p, stride=1, eps=1e-5):
    dn = ("NCDHW", "OIDHW", "NCDHW")
    prec = lax.Precision.HIGHEST

    def bn_train(y, g, b):
        mean = y.mean(axis=(0, 2, 3, 4), keepdims=True)
        var = ((y - mean) ** 2).mean(axis=(0, 2, 3, 4), keepdims=True)
        return ((y - mean) / jnp.sqrt(var + eps)
                * g.reshape(1, -1, 1, 1, 1) + b.reshape(1, -1, 1, 1, 1))

    w1 = jnp.transpose(p["w1"], (4, 3, 0, 1, 2))          # (O,I,kd,kh,kw)
    w2 = jnp.transpose(p["w2"], (4, 3, 0, 1, 2))
    out = lax.conv_general_dilated(x, w1, (stride,) * 3, [(1, 1)] * 3,
                                   dimension_numbers=dn, precision=prec)
    out = jax.nn.relu(bn_train(out, p["g1"], p["b1"]))
    out = lax.conv_general_dilated(out, w2, (1, 1, 1), [(1, 1)] * 3,
                                   dimension_numbers=dn, precision=prec)
    out = bn_train(out, p["g2"], p["b2"]) + x
    return jax.nn.relu(out)


if __name__ == "__main__":
    # BasicBlock(in_planes=16, planes=16), stride=1, downsample=None
    # (expansion=1 -> identity residual requires in_planes == planes).
    planes = in_planes = 16
    N, D, H, W = 2, 6, 10, 8         # M = 960 voxels -> 2 row tiles (one padded)

    key = jax.random.PRNGKey(0)
    kx, kp = jax.random.split(key)
    x = jax.random.normal(kx, (N, in_planes, D, H, W), dtype=jnp.float32)
    params = init_params(kp, in_planes, planes)

    out = jax.block_until_ready(basic_block_forward(x, params, stride=1))
    ref = jax.block_until_ready(ref_forward(x, params, stride=1))

    assert out.shape == (N, planes, D, H, W), out.shape
    # Kernel uses bf16 MXU operands (f32 accumulate) vs. an f32 HIGHEST
    # reference; tolerance sized for bf16 rounding through two 3x3x3 convs.
    max_abs = float(jnp.max(jnp.abs(out - ref)))
    rel_l2 = float(jnp.sqrt(jnp.sum((out - ref) ** 2) / jnp.sum(ref ** 2)))
    assert jnp.allclose(out, ref, atol=5e-2, rtol=5e-2), (max_abs, rel_l2)
    assert rel_l2 < 2e-2, rel_l2
    print("KERNEL_OK")
</pallas_src>

<mosaic_0001>
module attributes {stable_mosaic.version = 11 : i64} {
  func.func @_convT_stats_kernel(%arg0: i32, %arg1: memref<16x432xbf16, #tpu.memory_space<vmem>>, %arg2: memref<432x512xbf16, #tpu.memory_space<vmem>>, %arg3: memref<16x512xf32, #tpu.memory_space<vmem>>, %arg4: memref<1x16x1xf32, #tpu.memory_space<vmem>>, %arg5: memref<1x16x1xf32, #tpu.memory_space<vmem>>) attributes {dimension_semantics = [#tpu.dimension_semantics<parallel>], iteration_bounds = array<i64: 2>, scalar_prefetch = 0 : i64, scratch_operands = 0 : i64, tpu.core_type = #tpu.core_type<tc>, window_params = [{pipeline_mode = #tpu.pipeline_mode<synchronous>, transform_indices = @transform_0, window_bounds = array<i64: 16, 432>}, {transform_indices = @transform_1, window_bounds = array<i64: 432, 512>}, {transform_indices = @transform_2, window_bounds = array<i64: 16, 512>}, {transform_indices = @transform_3, window_bounds = array<i64: 1, 16, 1>}, {transform_indices = @transform_4, window_bounds = array<i64: 1, 16, 1>}]} {
    %c0 = arith.constant 0 : index
    %c0_0 = arith.constant 0 : index
    %0 = vector.load %arg1[%c0, %c0_0] : memref<16x432xbf16, #tpu.memory_space<vmem>>, vector<16x432xbf16>
    %c0_1 = arith.constant 0 : index
    %c0_2 = arith.constant 0 : index
    %1 = vector.load %arg2[%c0_1, %c0_2] : memref<432x512xbf16, #tpu.memory_space<vmem>>, vector<432x512xbf16>
    %cst = arith.constant dense<0.000000e+00> : vector<16x512xf32>
    %2 = tpu.matmul %0, %1, %cst {dimension_numbers = #tpu.dot_dimension_numbers<[1], [0], [0], [1], [0, 0, 1, 1], [], []>} : vector<16x432xbf16>, vector<432x512xbf16>, vector<16x512xf32> -> vector<16x512xf32>
    %c0_3 = arith.constant 0 : index
    %c0_4 = arith.constant 0 : index
    %3 = vector.load %arg3[%c0_3, %c0_4] : memref<16x512xf32, #tpu.memory_space<vmem>>, vector<16x512xf32>
    tpu.vector_store %arg3[%c0_3, %c0_4], %2 {strides = array<i32>} : memref<16x512xf32, #tpu.memory_space<vmem>>, vector<16x512xf32>,
    %cst_5 = arith.constant dense<0.000000e+00> : vector<16xf32>
    %4 = vector.multi_reduction <add>, %2, %cst_5 [1] : vector<16x512xf32> to vector<16xf32>
    %5 = vector.shape_cast %4 : vector<16xf32> to vector<16x1xf32>
    %6 = vector.shape_cast %5 : vector<16x1xf32> to vector<1x16x1xf32>
    %c0_6 = arith.constant 0 : index
    %c0_7 = arith.constant 0 : index
    %c0_8 = arith.constant 0 : index
    %7 = vector.load %arg4[%c0_6, %c0_7, %c0_8] : memref<1x16x1xf32, #tpu.memory_space<vmem>>, vector<1x16x1xf32>
    tpu.vector_store %arg4[%c0_6, %c0_7, %c0_8], %6 {strides = array<i32>} : memref<1x16x1xf32, #tpu.memory_space<vmem>>, vector<1x16x1xf32>,
    %8 = arith.mulf %2, %2 : vector<16x512xf32>
    %cst_9 = arith.constant dense<0.000000e+00> : vector<16xf32>
    %9 = vector.multi_reduction <add>, %8, %cst_9 [1] : vector<16x512xf32> to vector<16xf32>
    %10 = vector.shape_cast %9 : vector<16xf32> to vector<16x1xf32>
    %11 = vector.shape_cast %10 : vector<16x1xf32> to vector<1x16x1xf32>
    %c0_10 = arith.constant 0 : index
    %c0_11 = arith.constant 0 : index
    %c0_12 = arith.constant 0 : index
    %12 = vector.load %arg5[%c0_10, %c0_11, %c0_12] : memref<1x16x1xf32, #tpu.memory_space<vmem>>, vector<1x16x1xf32>
    tpu.vector_store %arg5[%c0_10, %c0_11, %c0_12], %11 {strides = array<i32>} : memref<1x16x1xf32, #tpu.memory_space<vmem>>, vector<1x16x1xf32>,
    return
  }
  func.func @transform_0(%arg0: i32) -> (i32, i32) {
    %c0_i32 = arith.constant 0 : i32
    %c0_i32_0 = arith.constant 0 : i32
    %c0_i32_1 = arith.constant 0 : i32
    return %c0_i32, %c0_i32_0 : i32, i32
  }
  func.func @transform_1(%arg0: i32) -> (i32, i32) {
    %c0_i32 = arith.constant 0 : i32
    %c0_i32_0 = arith.constant 0 : i32
    return %c0_i32, %arg0 : i32, i32
  }
  func.func @transform_2(%arg0: i32) -> (i32, i32) {
    %c0_i32 = arith.constant 0 : i32
    %c0_i32_0 = arith.constant 0 : i32
    return %c0_i32, %arg0 : i32, i32
  }
  func.func @transform_3(%arg0: i32) -> (i32, i32, i32) {
    %c0_i32 = arith.constant 0 : i32
    %c0_i32_0 = arith.constant 0 : i32
    %c0_i32_1 = arith.constant 0 : i32
    return %arg0, %c0_i32, %c0_i32_0 : i32, i32, i32
  }
  func.func @transform_4(%arg0: i32) -> (i32, i32, i32) {
    %c0_i32 = arith.constant 0 : i32
    %c0_i32_0 = arith.constant 0 : i32
    %c0_i32_1 = arith.constant 0 : i32
    return %arg0, %c0_i32, %c0_i32_0 : i32, i32, i32
  }
}

module attributes {stable_mosaic.version = 11 : i64} {
  func.func @_bn_relu_kernel(%arg0: i32, %arg1: memref<16x512xf32, #tpu.memory_space<vmem>>, %arg2: memref<16x1xf32, #tpu.memory_space<vmem>>, %arg3: memref<16x1xf32, #tpu.memory_space<vmem>>, %arg4: memref<16x512xf32, #tpu.memory_space<vmem>>) attributes {dimension_semantics = [#tpu.dimension_semantics<parallel>], iteration_bounds = array<i64: 2>, scalar_prefetch = 0 : i64, scratch_operands = 0 : i64, tpu.core_type = #tpu.core_type<tc>, window_params = [{transform_indices = @transform_0, window_bounds = array<i64: 16, 512>}, {pipeline_mode = #tpu.pipeline_mode<synchronous>, transform_indices = @transform_1, window_bounds = array<i64: 16, 1>}, {pipeline_mode = #tpu.pipeline_mode<synchronous>, transform_indices = @transform_2, window_bounds = array<i64: 16, 1>}, {transform_indices = @transform_3, window_bounds = array<i64: 16, 512>}]} {
    %c0 = arith.constant 0 : index
    %c0_0 = arith.constant 0 : index
    %0 = vector.load %arg1[%c0, %c0_0] : memref<16x512xf32, #tpu.memory_space<vmem>>, vector<16x512xf32>
    %c0_1 = arith.constant 0 : index
    %c0_2 = arith.constant 0 : index
    %1 = vector.load %arg2[%c0_1, %c0_2] : memref<16x1xf32, #tpu.memory_space<vmem>>, vector<16x1xf32>
    %2 = vector.broadcast %1 : vector<16x1xf32> to vector<16x512xf32>
    %3 = arith.mulf %0, %2 : vector<16x512xf32>
    %c0_3 = arith.constant 0 : index
    %c0_4 = arith.constant 0 : index
    %4 = vector.load %arg3[%c0_3, %c0_4] : memref<16x1xf32, #tpu.memory_space<vmem>>, vector<16x1xf32>
    %5 = vector.broadcast %4 : vector<16x1xf32> to vector<16x512xf32>
    %6 = arith.addf %3, %5 : vector<16x512xf32>
    %cst = arith.constant 0.000000e+00 : f32
    %7 = vector.broadcast %cst : f32 to vector<16x512xf32>
    %8 = arith.maximumf %6, %7 : vector<16x512xf32>
    %c0_5 = arith.constant 0 : index
    %c0_6 = arith.constant 0 : index
    %9 = vector.load %arg4[%c0_5, %c0_6] : memref<16x512xf32, #tpu.memory_space<vmem>>, vector<16x512xf32>
    tpu.vector_store %arg4[%c0_5, %c0_6], %8 {strides = array<i32>} : memref<16x512xf32, #tpu.memory_space<vmem>>, vector<16x512xf32>,
    return
  }
  func.func @transform_0(%arg0: i32) -> (i32, i32) {
    %c0_i32 = arith.constant 0 : i32
    %c0_i32_0 = arith.constant 0 : i32
    return %c0_i32, %arg0 : i32, i32
  }
  func.func @transform_1(%arg0: i32) -> (i32, i32) {
    %c0_i32 = arith.constant 0 : i32
    %c0_i32_0 = arith.constant 0 : i32
    %c0_i32_1 = arith.constant 0 : i32
    return %c0_i32, %c0_i32_0 : i32, i32
  }
  func.func @transform_2(%arg0: i32) -> (i32, i32) {
    %c0_i32 = arith.constant 0 : i32
    %c0_i32_0 = arith.constant 0 : i32
    %c0_i32_1 = arith.constant 0 : i32
    return %c0_i32, %c0_i32_0 : i32, i32
  }
  func.func @transform_3(%arg0: i32) -> (i32, i32) {
    %c0_i32 = arith.constant 0 : i32
    %c0_i32_0 = arith.constant 0 : i32
    return %c0_i32, %arg0 : i32, i32
  }
}

module attributes {stable_mosaic.version = 11 : i64} {
  func.func @_bn_add_relu_kernel(%arg0: i32, %arg1: memref<16x512xf32, #tpu.memory_space<vmem>>, %arg2: memref<16x1xf32, #tpu.memory_space<vmem>>, %arg3: memref<16x1xf32, #tpu.memory_space<vmem>>, %arg4: memref<16x512xf32, #tpu.memory_space<vmem>>, %arg5: memref<16x512xf32, #tpu.memory_space<vmem>>) attributes {dimension_semantics = [#tpu.dimension_semantics<parallel>], iteration_bounds = array<i64: 2>, scalar_prefetch = 0 : i64, scratch_operands = 0 : i64, tpu.core_type = #tpu.core_type<tc>, window_params = [{transform_indices = @transform_0, window_bounds = array<i64: 16, 512>}, {pipeline_mode = #tpu.pipeline_mode<synchronous>, transform_indices = @transform_1, window_bounds = array<i64: 16, 1>}, {pipeline_mode = #tpu.pipeline_mode<synchronous>, transform_indices = @transform_2, window_bounds = array<i64: 16, 1>}, {transform_indices = @transform_3, window_bounds = array<i64: 16, 512>}, {transform_indices = @transform_4, window_bounds = array<i64: 16, 512>}]} {
    %c0 = arith.constant 0 : index
    %c0_0 = arith.constant 0 : index
    %0 = vector.load %arg1[%c0, %c0_0] : memref<16x512xf32, #tpu.memory_space<vmem>>, vector<16x512xf32>
    %c0_1 = arith.constant 0 : index
    %c0_2 = arith.constant 0 : index
    %1 = vector.load %arg2[%c0_1, %c0_2] : memref<16x1xf32, #tpu.memory_space<vmem>>, vector<16x1xf32>
    %2 = vector.broadcast %1 : vector<16x1xf32> to vector<16x512xf32>
    %3 = arith.mulf %0, %2 : vector<16x512xf32>
    %c0_3 = arith.constant 0 : index
    %c0_4 = arith.constant 0 : index
    %4 = vector.load %arg3[%c0_3, %c0_4] : memref<16x1xf32, #tpu.memory_space<vmem>>, vector<16x1xf32>
    %5 = vector.broadcast %4 : vector<16x1xf32> to vector<16x512xf32>
    %6 = arith.addf %3, %5 : vector<16x512xf32>
    %c0_5 = arith.constant 0 : index
    %c0_6 = arith.constant 0 : index
    %7 = vector.load %arg4[%c0_5, %c0_6] : memref<16x512xf32, #tpu.memory_space<vmem>>, vector<16x512xf32>
    %8 = arith.addf %6, %7 : vector<16x512xf32>
    %cst = arith.constant 0.000000e+00 : f32
    %9 = vector.broadcast %cst : f32 to vector<16x512xf32>
    %10 = arith.maximumf %8, %9 : vector<16x512xf32>
    %c0_7 = arith.constant 0 : index
    %c0_8 = arith.constant 0 : index
    %11 = vector.load %arg5[%c0_7, %c0_8] : memref<16x512xf32, #tpu.memory_space<vmem>>, vector<16x512xf32>
    tpu.vector_store %arg5[%c0_7, %c0_8], %10 {strides = array<i32>} : memref<16x512xf32, #tpu.memory_space<vmem>>, vector<16x512xf32>,
    return
  }
  func.func @transform_0(%arg0: i32) -> (i32, i32) {
    %c0_i32 = arith.constant 0 : i32
    %c0_i32_0 = arith.constant 0 : i32
    return %c0_i32, %arg0 : i32, i32
  }
  func.func @transform_1(%arg0: i32) -> (i32, i32) {
    %c0_i32 = arith.constant 0 : i32
    %c0_i32_0 = arith.constant 0 : i32
    %c0_i32_1 = arith.constant 0 : i32
    return %c0_i32, %c0_i32_0 : i32, i32
  }
  func.func @transform_2(%arg0: i32) -> (i32, i32) {
    %c0_i32 = arith.constant 0 : i32
    %c0_i32_0 = arith.constant 0 : i32
    %c0_i32_1 = arith.constant 0 : i32
    return %c0_i32, %c0_i32_0 : i32, i32
  }
  func.func @transform_3(%arg0: i32) -> (i32, i32) {
    %c0_i32 = arith.constant 0 : i32
    %c0_i32_0 = arith.constant 0 : i32
    return %c0_i32, %arg0 : i32, i32
  }
  func.func @transform_4(%arg0: i32) -> (i32, i32) {
    %c0_i32 = arith.constant 0 : i32
    %c0_i32_0 = arith.constant 0 : i32
    return %c0_i32, %arg0 : i32, i32
  }
}

</mosaic_0001>

<llo_original>
// kernel: basic_block_forward.5
$region0: #{basic_block_forward.5}
  #allocation0 [shape = 'u32[]', space=smem, size = 0x4, offset = 0x4, fixed_abs, tag = 'smem constant byte address 0x4 - core index']
  #allocation1 [shape = 'u32[72,128]{1,0:T(1,128)}', space=vmem, size = 0x9000, scoped, tag = 'internal scratch']
  %s0 = inlined_call_operand.vmem [shape: f32[16,1024], index: 0, kind: input, shape index: {}, may-alias: {0,3}]
  %s1 = inlined_call_operand.vmem [shape: f32[16,1], index: 1, kind: input, shape index: {}]
  %s2 = inlined_call_operand.vmem [shape: f32[16,1], index: 2, kind: input, shape index: {}]
  %s3 = inlined_call_operand.vmem [shape: f32[16,1024], index: 3, kind: output, shape index: {}, may-alias: {0,3}]
  %s4 = sld [smem:[#allocation0]]
  $region87: #{basic_block_forward.5} parent=0
    _
  %s6 = ssub.s32 1, %s4
  %s7 = scalar_select 0, %s6, %s4
  $region1: #{basic_block_forward.5} parent=0
    #allocation2 [shape = 'u8[65536]{0}', space=vmem, size = 0x10000, scoped, tag = 'input window, operand 0']
    #allocation3 [shape = 'u8[65536]{0}', space=vmem, size = 0x10000, scoped, tag = 'output window, operand 0']
    loop: start=0, step=1, limit=4
    $region2: #{basic_block_forward.5} parent=1 // loop_pre_header
      _
    $region3: #{basic_block_forward.5} parent=1 // loop_header
      %s9 = sphi 0, %s13
      %p10 = scmp.ge.s32.totalorder %s9, 4
      %s19 = sphi 0, %s21
      %s22 = sphi 0, %s19
      %s23 = sphi 0, %s22
      %s39 = sphi 0, %s23
      %s43 = sphi 0, %s43
      %s45 = sphi 0, %s43
      %s46 = sphi 0, %s45
      %s60 = sphi 0, %s46
      %s64 = sphi 0, %s64
      %s66 = sphi 0, %s64
      %s67 = sphi 0, %s66
      %s81 = sphi 0, %s67
      %s87 = sphi 0, %s89
      %s90 = sphi 0, %s87
      %s91 = sphi 0, %s90
      %s107 = sphi 0, %s91
    $region4: #{basic_block_forward.5} parent=1 // loop_header_branch
      %12 = sbr.rel (%p10) target = $region8
    $region5: #{basic_block_forward.5} parent=1 // loop_body
      %s14 = ssub.s32 %s9, 1
      %s15 = ssub.s32 %s9, 2
      %s16 = sadd.s32 %s9, 1
      %s17 = ssub.s32 %s9, %s16
      %p18 = scmp.eq.s32.totalorder %s17, 0
      %s20 = sadd.s32 %s19, 1
      %s21 = scalar_select %p18, %s19, %s20
      %p24 = pneg %p18
      %p25 = scmp.eq.s32.totalorder %s9, 1
      %p26 = por %p24, %p25
      %p27 = scmp.ne.s32.totalorder %s19, %s22
      %p28 = scmp.eq.s32.totalorder %s9, 0
      %p29 = por %p27, %p28
      %p30 = scmp.ne.s32.totalorder %s19, %s22
      %p31 = scmp.eq.s32.totalorder %s14, 1
      %p32 = por %p30, %p31
      %p33 = scmp.ne.s32.totalorder %s22, %s23
      %p34 = scmp.eq.s32.totalorder %s14, 0
      %p35 = por %p33, %p34
      %p36 = scmp.ne.s32.totalorder %s22, %s23
      %p37 = scmp.eq.s32.totalorder %s15, 1
      %p38 = por %p36, %p37
      %p40 = scmp.ne.s32.totalorder %s23, %s39
      %p41 = scmp.eq.s32.totalorder %s15, 0
      %p42 = por %p40, %p41
      %s44 = sadd.s32 %s43, 1
      %p47 = scmp.eq.s32.totalorder %s9, 1
      %p48 = scmp.ne.s32.totalorder %s43, %s45
      %p49 = scmp.eq.s32.totalorder %s9, 0
      %p50 = por %p48, %p49
      %p51 = scmp.ne.s32.totalorder %s43, %s45
      %p52 = scmp.eq.s32.totalorder %s14, 1
      %p53 = por %p51, %p52
      %p54 = scmp.ne.s32.totalorder %s45, %s46
      %p55 = scmp.eq.s32.totalorder %s14, 0
      %p56 = por %p54, %p55
      %p57 = scmp.ne.s32.totalorder %s45, %s46
      %p58 = scmp.eq.s32.totalorder %s15, 1
      %p59 = por %p57, %p58
      %p61 = scmp.ne.s32.totalorder %s46, %s60
      %p62 = scmp.eq.s32.totalorder %s15, 0
      %p63 = por %p61, %p62
      %s65 = sadd.s32 %s64, 1
      %p68 = scmp.eq.s32.totalorder %s9, 1
      %p69 = scmp.ne.s32.totalorder %s64, %s66
      %p70 = scmp.eq.s32.totalorder %s9, 0
      %p71 = por %p69, %p70
      %p72 = scmp.ne.s32.totalorder %s64, %s66
      %p73 = scmp.eq.s32.totalorder %s14, 1
      %p74 = por %p72, %p73
      %p75 = scmp.ne.s32.totalorder %s66, %s67
      %p76 = scmp.eq.s32.totalorder %s14, 0
      %p77 = por %p75, %p76
      %p78 = scmp.ne.s32.totalorder %s66, %s67
      %p79 = scmp.eq.s32.totalorder %s15, 1
      %p80 = por %p78, %p79
      %p82 = scmp.ne.s32.totalorder %s67, %s81
      %p83 = scmp.eq.s32.totalorder %s15, 0
      %p84 = por %p82, %p83
      %s85 = ssub.s32 %s9, %s16
      %p86 = scmp.eq.s32.totalorder %s85, 0
      %s88 = sadd.s32 %s87, 1
      %s89 = scalar_select %p86, %s87, %s88
      %p92 = pneg %p86
      %p93 = scmp.eq.s32.totalorder %s9, 1
      %p94 = por %p92, %p93
      %p95 = scmp.ne.s32.totalorder %s87, %s90
      %p96 = scmp.eq.s32.totalorder %s9, 0
      %p97 = por %p95, %p96
      %p98 = scmp.ne.s32.totalorder %s87, %s90
      %p99 = scmp.eq.s32.totalorder %s14, 1
      %p100 = por %p98, %p99
      %p101 = scmp.ne.s32.totalorder %s90, %s91
      %p102 = scmp.eq.s32.totalorder %s14, 0
      %p103 = por %p101, %p102
      %p104 = scmp.ne.s32.totalorder %s90, %s91
      %p105 = scmp.eq.s32.totalorder %s15, 1
      %p106 = por %p104, %p105
      %p108 = scmp.ne.s32.totalorder %s91, %s107
      %p109 = scmp.eq.s32.totalorder %s15, 0
      %p110 = por %p108, %p109
      %p111 = scmp.le.s32.totalorder 1, %s9
      %p112 = scmp.lt.s32.totalorder %s9, 3
      %p113 = pnand %p111, %p112
      %p114 = pneg %p113
      // Predicated region
      $region9: #{basic_block_forward.5} parent=5 // pred_check
        _
      $region10: #{basic_block_forward.5} parent=5 // pred_check_branch
        %116 = sbr.rel (%p113) target = $region12
      $region11: #{basic_block_forward.5} parent=5 // pred_region
        %s117 = ssub.s32 %s9, 1
        // Predicated region
        $region13: #{basic_block_forward.5} parent=11 // pred_check
          %p118 = pneg %p56
        $region14: #{basic_block_forward.5} parent=11 // pred_check_branch
          %120 = sbr.rel (%p118) target = $region16
        $region15: #{basic_block_forward.5} parent=11 // pred_region
          _
        $region16: #{basic_block_forward.5} parent=11 // pred_fallthru
          _
        // Predicated region
        $region17: #{basic_block_forward.5} parent=11 // pred_check
          %p121 = pneg %p77
        $region18: #{basic_block_forward.5} parent=11 // pred_check_branch
          %123 = sbr.rel (%p121) target = $region20
        $region19: #{basic_block_forward.5} parent=11 // pred_region
          _
        $region20: #{basic_block_forward.5} parent=11 // pred_fallthru
          _
      $region12: #{basic_block_forward.5} parent=5 // pred_fallthru
        _
      %p124 = scmp.lt.s32.totalorder %s9, 2
      // Predicated region
      $region21: #{basic_block_forward.5} parent=5 // pred_check
        %p125 = pneg %p124
      $region22: #{basic_block_forward.5} parent=5 // pred_check_branch
        %127 = sbr.rel (%p125) target = $region24
      $region23: #{basic_block_forward.5} parent=5 // pred_region
        // Predicated region
        $region25: #{basic_block_forward.5} parent=23 // pred_check
          %p128 = pneg %p29
        $region26: #{basic_block_forward.5} parent=23 // pred_check_branch
          %130 = sbr.rel (%p128) target = $region28
        $region27: #{basic_block_forward.5} parent=23 // pred_region
          %s131 = sand.u32 %s19, 1
          %s132 = sand.u32 %s19, 1
          %s133 = smul.addr %s132, 64
          %s134 = scalar_lea.vmem [#allocation2], %s133
          %s135 = smul.u32 4, %s9
          %s136 = smul.addr %s135, 8
          %s137 = scalar_lea.vmem %s0, %s136
          // Predicated region
          $region29: #{basic_block_forward.5} parent=27 // pred_check
            _
          $region30: #{basic_block_forward.5} parent=27 // pred_check_branch
            %139 = sbr.rel (0) target = $region32
          $region31: #{basic_block_forward.5} parent=27 // pred_region
            // Predicated region
            $region33: #{basic_block_forward.5} parent=31 // pred_check
              _
            $region34: #{basic_block_forward.5} parent=31 // pred_check_branch
              %141 = sbr.rel (0) target = $region36
            $region35: #{basic_block_forward.5} parent=31 // pred_region
              loop: start=0, step=1, limit=1
              $region37: #{basic_block_forward.5} parent=35 // loop_pre_header
                _
              $region38: #{basic_block_forward.5} parent=35 // loop_header
                %s143 = sphi 0, %s147
                %p144 = scmp.ge.s32.totalorder %s143, 1
                %s148 = sphi %s137, %s137
                %s149 = sphi %s134, %s134
              $region39: #{basic_block_forward.5} parent=35 // loop_header_branch
                %146 = sbr.rel (%p144) target = $region43
              $region40: #{basic_block_forward.5} parent=35 // loop_body
                %v150 = vld [vmem:[%s148] sm:$0xff]
                %151 = vst [vmem:[%s149] sm:$0xff] %v150
                %v152 = vld [vmem:[%s148 + $0x8] sm:$0xff]
                %153 = vst [vmem:[%s149 + $0x8] sm:$0xff] %v152
                %v154 = vld [vmem:[%s148 + $0x10] sm:$0xff]
                %155 = vst [vmem:[%s149 + $0x10] sm:$0xff] %v154
                %v156 = vld [vmem:[%s148 + $0x18] sm:$0xff]
                %157 = vst [vmem:[%s149 + $0x18] sm:$0xff] %v156
                %v158 = vld [vmem:[%s148 + $0x40] sm:$0xff]
                %159 = vst [vmem:[%s149 + $0x20] sm:$0xff] %v158
                %v160 = vld [vmem:[%s148 + $0x48] sm:$0xff]
                %161 = vst [vmem:[%s149 + $0x28] sm:$0xff] %v160
                %v162 = vld [vmem:[%s148 + $0x50] sm:$0xff]
                %163 = vst [vmem:[%s149 + $0x30] sm:$0xff] %v162
                %v164 = vld [vmem:[%s148 + $0x58] sm:$0xff]
                %165 = vst [vmem:[%s149 + $0x38] sm:$0xff] %v164
              $region41: #{basic_block_forward.5} parent=35 // loop_footer
                %s147 = sadd.s32 1, %s143
              $region42: #{basic_block_forward.5} parent=35 // loop_footer_branch
                %142 = sbr.rel target = $region38
              $region43: #{basic_block_forward.5} parent=35 // loop_exit
                _
            $region36: #{basic_block_forward.5} parent=31 // pred_fallthru
              _
            // Predicated region
            $region44: #{basic_block_forward.5} parent=31 // pred_check
              _
            $region45: #{basic_block_forward.5} parent=31 // pred_check_branch
              %167 = sbr.rel target = $region47
            $region46: #{basic_block_forward.5} parent=31 // pred_region
              _
            $region47: #{basic_block_forward.5} parent=31 // pred_fallthru
              _
          $region32: #{basic_block_forward.5} parent=27 // pred_fallthru
            _
          %168 = vnop
        $region28: #{basic_block_forward.5} parent=23 // pred_fallthru
          _
      $region24: #{basic_block_forward.5} parent=5 // pred_fallthru
        _
      %p169 = scmp.le.s32.totalorder 1, %s9
      %p170 = scmp.lt.s32.totalorder %s9, 3
      %p171 = pnand %p169, %p170
      %p172 = pneg %p171
      // Predicated region
      $region48: #{basic_block_forward.5} parent=5 // pred_check
        _
      $region49: #{basic_block_forward.5} parent=5 // pred_check_branch
        %174 = sbr.rel (%p171) target = $region51
      $region50: #{basic_block_forward.5} parent=5 // pred_region
        %s175 = ssub.s32 %s9, 1
        %s176 = sand.u32 %s22, 1
        %s177 = sand.u32 %s22, 1
        %s178 = smul.addr %s177, 64
        %s179 = scalar_lea.vmem [#allocation2], %s178
        // Predicated region
        $region52: #{basic_block_forward.5} parent=50 // pred_check
          %p180 = pneg %p35
        $region53: #{basic_block_forward.5} parent=50 // pred_check_branch
          %182 = sbr.rel (%p180) target = $region55
        $region54: #{basic_block_forward.5} parent=50 // pred_region
          _
        $region55: #{basic_block_forward.5} parent=50 // pred_fallthru
          _
        %s183 = sand.u32 %s22, 1
        %s184 = sand.u32 %s22, 1
        %s185 = smul.addr %s184, 64
        %s186 = scalar_lea.vmem [#allocation2], %s185
        %p187 = pneg %p35
        %p188 = pneg %p32
        %p189 = pneg %p56
        %p190 = pneg %p53
        %p191 = pneg %p77
        %p192 = pneg %p74
        %p193 = pneg %p103
        %p194 = pneg %p100
        %s195 = sand.u32 %s90, 1
        %s196 = sand.u32 %s90, 1
        %s197 = smul.addr %s196, 64
        %s198 = scalar_lea.vmem [#allocation3], %s197
        %s199 = smul.u32 4, %s14
        %s200 = smul.u32 4, %s14
        %v201 = vld [vmem:[%s179] sm:$0xff]
        %v202 = vld [vmem:[%s179 + $0x8] sm:$0xff]
        %v203 = vld [vmem:[%s179 + $0x10] sm:$0xff]
        %v204 = vld [vmem:[%s179 + $0x18] sm:$0xff]
        %v205 = vld [vmem:[%s179 + $0x20] sm:$0xff]
        %v206 = vld [vmem:[%s179 + $0x28] sm:$0xff]
        %v207 = vld [vmem:[%s179 + $0x30] sm:$0xff]
        %v208 = vld [vmem:[%s179 + $0x38] sm:$0xff]
        %v209 = vld [vmem:[%s1] sm:$0xff]
        %v210 = vld [vmem:[%s1 + $0x8] sm:$0xff]
        %212 = vset.pattern.permute.xlu0 0
        %213 = vperm.xlu0 %212, %v209
        %v214 = vpop.permute.xlu0 %213
        %217 = vset.pattern.permute.xlu0 0
        %218 = vperm.xlu0 %217, %v210
        %v219 = vpop.permute.xlu0 %218
        %v221 = vmul.f32 %v201, %v214
        %v222 = vmul.f32 %v202, %v214
        %v223 = vmul.f32 %v203, %v214
        %v224 = vmul.f32 %v204, %v214
        %v225 = vmul.f32 %v205, %v219
        %v226 = vmul.f32 %v206, %v219
        %v227 = vmul.f32 %v207, %v219
        %v228 = vmul.f32 %v208, %v219
        %v229 = vld [vmem:[%s2] sm:$0xff]
        %v230 = vld [vmem:[%s2 + $0x8] sm:$0xff]
        %232 = vset.pattern.permute.xlu0 0
        %233 = vperm.xlu0 %232, %v229
        %v234 = vpop.permute.xlu0 %233
        %237 = vset.pattern.permute.xlu0 0
        %238 = vperm.xlu0 %237, %v230
        %v239 = vpop.permute.xlu0 %238
        %v241 = vadd.f32 %v221, %v234
        %v242 = vadd.f32 %v222, %v234
        %v243 = vadd.f32 %v223, %v234
        %v244 = vadd.f32 %v224, %v234
        %v245 = vadd.f32 %v225, %v239
        %v246 = vadd.f32 %v226, %v239
        %v247 = vadd.f32 %v227, %v239
        %v248 = vadd.f32 %v228, %v239
        %v249 = vmax.f32 %v241, 0.0
        %v250 = vmax.f32 %v242, 0.0
        %v251 = vmax.f32 %v243, 0.0
        %v252 = vmax.f32 %v244, 0.0
        %v253 = vmax.f32 %v245, 0.0
        %v254 = vmax.f32 %v246, 0.0
        %v255 = vmax.f32 %v247, 0.0
        %v256 = vmax.f32 %v248, 0.0
        %257 = vst [vmem:[%s198] sm:$0xff] %v249
        %258 = vst [vmem:[%s198 + $0x8] sm:$0xff] %v250
        %259 = vst [vmem:[%s198 + $0x10] sm:$0xff] %v251
        %260 = vst [vmem:[%s198 + $0x18] sm:$0xff] %v252
        %261 = vst [vmem:[%s198 + $0x20] sm:$0xff] %v253
        %262 = vst [vmem:[%s198 + $0x28] sm:$0xff] %v254
        %263 = vst [vmem:[%s198 + $0x30] sm:$0xff] %v255
        %264 = vst [vmem:[%s198 + $0x38] sm:$0xff] %v256
        %s265 = sand.u32 %s90, 1
        %s266 = sand.u32 %s90, 1
        %s267 = smul.addr %s266, 64
        %s268 = scalar_lea.vmem [#allocation3], %s267
        // Predicated region
        $region56: #{basic_block_forward.5} parent=50 // pred_check
          %p269 = pneg %p100
        $region57: #{basic_block_forward.5} parent=50 // pred_check_branch
          %271 = sbr.rel (%p269) target = $region59
        $region58: #{basic_block_forward.5} parent=50 // pred_region
          %s272 = smul.u32 4, %s14
          %s273 = smul.addr %s272, 8
          %s274 = scalar_lea.vmem %s3, %s273
          // Predicated region
          $region60: #{basic_block_forward.5} parent=58 // pred_check
            _
          $region61: #{basic_block_forward.5} parent=58 // pred_check_branch
            %276 = sbr.rel (0) target = $region63
          $region62: #{basic_block_forward.5} parent=58 // pred_region
            // Predicated region
            $region64: #{basic_block_forward.5} parent=62 // pred_check
              _
            $region65: #{basic_block_forward.5} parent=62 // pred_check_branch
              %278 = sbr.rel (0) target = $region67
            $region66: #{basic_block_forward.5} parent=62 // pred_region
              loop: start=0, step=1, limit=1
              $region68: #{basic_block_forward.5} parent=66 // loop_pre_header
                _
              $region69: #{basic_block_forward.5} parent=66 // loop_header
                %s280 = sphi 0, %s284
                %p281 = scmp.ge.s32.totalorder %s280, 1
                %s285 = sphi %s268, %s268
                %s286 = sphi %s274, %s274
              $region70: #{basic_block_forward.5} parent=66 // loop_header_branch
                %283 = sbr.rel (%p281) target = $region74
              $region71: #{basic_block_forward.5} parent=66 // loop_body
                %v287 = vld [vmem:[%s285] sm:$0xff]
                %288 = vst [vmem:[%s286] sm:$0xff] %v287
                %v289 = vld [vmem:[%s285 + $0x8] sm:$0xff]
                %290 = vst [vmem:[%s286 + $0x8] sm:$0xff] %v289
                %v291 = vld [vmem:[%s285 + $0x10] sm:$0xff]
                %292 = vst [vmem:[%s286 + $0x10] sm:$0xff] %v291
                %v293 = vld [vmem:[%s285 + $0x18] sm:$0xff]
                %294 = vst [vmem:[%s286 + $0x18] sm:$0xff] %v293
                %v295 = vld [vmem:[%s285 + $0x20] sm:$0xff]
                %296 = vst [vmem:[%s286 + $0x40] sm:$0xff] %v295
                %v297 = vld [vmem:[%s285 + $0x28] sm:$0xff]
                %298 = vst [vmem:[%s286 + $0x48] sm:$0xff] %v297
                %v299 = vld [vmem:[%s285 + $0x30] sm:$0xff]
                %300 = vst [vmem:[%s286 + $0x50] sm:$0xff] %v299
                %v301 = vld [vmem:[%s285 + $0x38] sm:$0xff]
                %302 = vst [vmem:[%s286 + $0x58] sm:$0xff] %v301
              $region72: #{basic_block_forward.5} parent=66 // loop_footer
                %s284 = sadd.s32 1, %s280
              $region73: #{basic_block_forward.5} parent=66 // loop_footer_branch
                %279 = sbr.rel target = $region69
              $region74: #{basic_block_forward.5} parent=66 // loop_exit
                _
            $region67: #{basic_block_forward.5} parent=62 // pred_fallthru
              _
            // Predicated region
            $region75: #{basic_block_forward.5} parent=62 // pred_check
              _
            $region76: #{basic_block_forward.5} parent=62 // pred_check_branch
              %304 = sbr.rel target = $region78
            $region77: #{basic_block_forward.5} parent=62 // pred_region
              _
            $region78: #{basic_block_forward.5} parent=62 // pred_fallthru
              _
          $region63: #{basic_block_forward.5} parent=58 // pred_fallthru
            _
          %305 = vnop
        $region59: #{basic_block_forward.5} parent=50 // pred_fallthru
          _
      $region51: #{basic_block_forward.5} parent=5 // pred_fallthru
        _
      %p306 = scmp.le.s32.totalorder 2, %s9
      // Predicated region
      $region79: #{basic_block_forward.5} parent=5 // pred_check
        %p307 = pneg %p306
      $region80: #{basic_block_forward.5} parent=5 // pred_check_branch
        %309 = sbr.rel (%p307) target = $region82
      $region81: #{basic_block_forward.5} parent=5 // pred_region
        %s310 = ssub.s32 %s9, 2
        // Predicated region
        $region83: #{basic_block_forward.5} parent=81 // pred_check
          %p311 = pneg %p106
        $region84: #{basic_block_forward.5} parent=81 // pred_check_branch
          %313 = sbr.rel (%p311) target = $region86
        $region85: #{basic_block_forward.5} parent=81 // pred_region
          %s314 = sand.u32 %s91, 1
          %s315 = sand.u32 %s91, 1
          %s316 = smul.addr %s315, 64
          %s317 = scalar_lea.vmem [#allocation3], %s316
        $region86: #{basic_block_forward.5} parent=81 // pred_fallthru
          _
      $region82: #{basic_block_forward.5} parent=5 // pred_fallthru
        _
    $region6: #{basic_block_forward.5} parent=1 // loop_footer
      %s13 = sadd.s32 1, %s9
    $region7: #{basic_block_forward.5} parent=1 // loop_footer_branch
      %8 = sbr.rel target = $region3
    $region8: #{basic_block_forward.5} parent=1 // loop_exit
      _

// kernel: basic_block_forward.4
$region0: #{basic_block_forward.4}
  #allocation0 [shape = 'u32[]', space=smem, size = 0x4, offset = 0x4, fixed_abs, tag = 'smem constant byte address 0x4 - core index']
  #allocation1 [shape = 'u32[72,128]{1,0:T(1,128)}', space=vmem, size = 0x9000, scoped, tag = 'internal scratch']
  %s0 = inlined_call_operand.vmem [shape: bf16[16,432], index: 0, kind: input, shape index: {}]
  %s1 = inlined_call_operand.vmem [shape: bf16[432,1024], index: 1, kind: input, shape index: {}]
  %s2 = inlined_call_operand.vmem [shape: f32[16,1024], index: 2, kind: output, shape index: {0}]
  %s3 = inlined_call_operand.vmem [shape: f32[2,16,1], index: 3, kind: output, shape index: {1}]
  %s4 = inlined_call_operand.vmem [shape: f32[2,16,1], index: 4, kind: output, shape index: {2}]
  %5 = xla_tuple %s2, %s3, %s4
  %s6 = sld [smem:[#allocation0]]
  $region99: #{basic_block_forward.4} parent=0
    _
  %s8 = ssub.s32 1, %s6
  %s9 = scalar_select 0, %s8, %s6
  $region1: #{basic_block_forward.4} parent=0
    #allocation2 [shape = 'u8[884736]{0}', space=vmem, size = 0xd8000, scoped, tag = 'input window, operand 1']
    #allocation3 [shape = 'u8[65536]{0}', space=vmem, size = 0x10000, scoped, tag = 'output window, operand 0']
    loop: start=0, step=1, limit=4
    $region2: #{basic_block_forward.4} parent=1 // loop_pre_header
      _
    $region3: #{basic_block_forward.4} parent=1 // loop_header
      %s11 = sphi 0, %s15
      %p12 = scmp.ge.s32.totalorder %s11, 4
      %s19 = sphi 0, %s19
      %s21 = sphi 0, %s19
      %s22 = sphi 0, %s21
      %s36 = sphi 0, %s22
      %s42 = sphi 0, %s44
      %s45 = sphi 0, %s42
      %s46 = sphi 0, %s45
      %s62 = sphi 0, %s46
      %s68 = sphi 0, %s70
      %s71 = sphi 0, %s68
      %s72 = sphi 0, %s71
      %s88 = sphi 0, %s72
      %s94 = sphi 0, %s96
      %s97 = sphi 0, %s94
      %s98 = sphi 0, %s97
      %s114 = sphi 0, %s98
      %s120 = sphi 0, %s122
      %s123 = sphi 0, %s120
      %s124 = sphi 0, %s123
      %s140 = sphi 0, %s124
    $region4: #{basic_block_forward.4} parent=1 // loop_header_branch
      %14 = sbr.rel (%p12) target = $region8
    $region5: #{basic_block_forward.4} parent=1 // loop_body
      %s16 = ssub.s32 %s11, 1
      %s17 = ssub.s32 %s11, 2
      %s18 = sadd.s32 %s11, 1
      %s20 = sadd.s32 %s19, 1
      %p23 = scmp.eq.s32.totalorder %s11, 1
      %p24 = scmp.ne.s32.totalorder %s19, %s21
      %p25 = scmp.eq.s32.totalorder %s11, 0
      %p26 = por %p24, %p25
      %p27 = scmp.ne.s32.totalorder %s19, %s21
      %p28 = scmp.eq.s32.totalorder %s16, 1
      %p29 = por %p27, %p28
      %p30 = scmp.ne.s32.totalorder %s21, %s22
      %p31 = scmp.eq.s32.totalorder %s16, 0
      %p32 = por %p30, %p31
      %p33 = scmp.ne.s32.totalorder %s21, %s22
      %p34 = scmp.eq.s32.totalorder %s17, 1
      %p35 = por %p33, %p34
      %p37 = scmp.ne.s32.totalorder %s22, %s36
      %p38 = scmp.eq.s32.totalorder %s17, 0
      %p39 = por %p37, %p38
      %s40 = ssub.s32 %s11, %s18
      %p41 = scmp.eq.s32.totalorder %s40, 0
      %s43 = sadd.s32 %s42, 1
      %s44 = scalar_select %p41, %s42, %s43
      %p47 = pneg %p41
      %p48 = scmp.eq.s32.totalorder %s11, 1
      %p49 = por %p47, %p48
      %p50 = scmp.ne.s32.totalorder %s42, %s45
      %p51 = scmp.eq.s32.totalorder %s11, 0
      %p52 = por %p50, %p51
      %p53 = scmp.ne.s32.totalorder %s42, %s45
      %p54 = scmp.eq.s32.totalorder %s16, 1
      %p55 = por %p53, %p54
      %p56 = scmp.ne.s32.totalorder %s45, %s46
      %p57 = scmp.eq.s32.totalorder %s16, 0
      %p58 = por %p56, %p57
      %p59 = scmp.ne.s32.totalorder %s45, %s46
      %p60 = scmp.eq.s32.totalorder %s17, 1
      %p61 = por %p59, %p60
      %p63 = scmp.ne.s32.totalorder %s46, %s62
      %p64 = scmp.eq.s32.totalorder %s17, 0
      %p65 = por %p63, %p64
      %s66 = ssub.s32 %s11, %s18
      %p67 = scmp.eq.s32.totalorder %s66, 0
      %s69 = sadd.s32 %s68, 1
      %s70 = scalar_select %p67, %s68, %s69
      %p73 = pneg %p67
      %p74 = scmp.eq.s32.totalorder %s11, 1
      %p75 = por %p73, %p74
      %p76 = scmp.ne.s32.totalorder %s68, %s71
      %p77 = scmp.eq.s32.totalorder %s11, 0
      %p78 = por %p76, %p77
      %p79 = scmp.ne.s32.totalorder %s68, %s71
      %p80 = scmp.eq.s32.totalorder %s16, 1
      %p81 = por %p79, %p80
      %p82 = scmp.ne.s32.totalorder %s71, %s72
      %p83 = scmp.eq.s32.totalorder %s16, 0
      %p84 = por %p82, %p83
      %p85 = scmp.ne.s32.totalorder %s71, %s72
      %p86 = scmp.eq.s32.totalorder %s17, 1
      %p87 = por %p85, %p86
      %p89 = scmp.ne.s32.totalorder %s72, %s88
      %p90 = scmp.eq.s32.totalorder %s17, 0
      %p91 = por %p89, %p90
      %s92 = ssub.s32 %s11, %s18
      %p93 = scmp.eq.s32.totalorder %s92, 0
      %s95 = sadd.s32 %s94, 1
      %s96 = scalar_select %p93, %s94, %s95
      %p99 = pneg %p93
      %p100 = scmp.eq.s32.totalorder %s11, 1
      %p101 = por %p99, %p100
      %p102 = scmp.ne.s32.totalorder %s94, %s97
      %p103 = scmp.eq.s32.totalorder %s11, 0
      %p104 = por %p102, %p103
      %p105 = scmp.ne.s32.totalorder %s94, %s97
      %p106 = scmp.eq.s32.totalorder %s16, 1
      %p107 = por %p105, %p106
      %p108 = scmp.ne.s32.totalorder %s97, %s98
      %p109 = scmp.eq.s32.totalorder %s16, 0
      %p110 = por %p108, %p109
      %p111 = scmp.ne.s32.totalorder %s97, %s98
      %p112 = scmp.eq.s32.totalorder %s17, 1
      %p113 = por %p111, %p112
      %p115 = scmp.ne.s32.totalorder %s98, %s114
      %p116 = scmp.eq.s32.totalorder %s17, 0
      %p117 = por %p115, %p116
      %s118 = ssub.s32 %s11, %s18
      %p119 = scmp.eq.s32.totalorder %s118, 0
      %s121 = sadd.s32 %s120, 1
      %s122 = scalar_select %p119, %s120, %s121
      %p125 = pneg %p119
      %p126 = scmp.eq.s32.totalorder %s11, 1
      %p127 = por %p125, %p126
      %p128 = scmp.ne.s32.totalorder %s120, %s123
      %p129 = scmp.eq.s32.totalorder %s11, 0
      %p130 = por %p128, %p129
      %p131 = scmp.ne.s32.totalorder %s120, %s123
      %p132 = scmp.eq.s32.totalorder %s16, 1
      %p133 = por %p131, %p132
      %p134 = scmp.ne.s32.totalorder %s123, %s124
      %p135 = scmp.eq.s32.totalorder %s16, 0
      %p136 = por %p134, %p135
      %p137 = scmp.ne.s32.totalorder %s123, %s124
      %p138 = scmp.eq.s32.totalorder %s17, 1
      %p139 = por %p137, %p138
      %p141 = scmp.ne.s32.totalorder %s124, %s140
      %p142 = scmp.eq.s32.totalorder %s17, 0
      %p143 = por %p141, %p142
      %p144 = scmp.le.s32.totalorder 1, %s11
      %p145 = scmp.lt.s32.totalorder %s11, 3
      %p146 = pnand %p144, %p145
      %p147 = pneg %p146
      // Predicated region
      $region9: #{basic_block_forward.4} parent=5 // pred_check
        _
      $region10: #{basic_block_forward.4} parent=5 // pred_check_branch
        %149 = sbr.rel (%p146) target = $region12
      $region11: #{basic_block_forward.4} parent=5 // pred_region
        %s150 = ssub.s32 %s11, 1
        // Predicated region
        $region13: #{basic_block_forward.4} parent=11 // pred_check
          %p151 = pneg %p32
        $region14: #{basic_block_forward.4} parent=11 // pred_check_branch
          %153 = sbr.rel (%p151) target = $region16
        $region15: #{basic_block_forward.4} parent=11 // pred_region
          _
        $region16: #{basic_block_forward.4} parent=11 // pred_fallthru
          _
      $region12: #{basic_block_forward.4} parent=5 // pred_fallthru
        _
      %p154 = scmp.lt.s32.totalorder %s11, 2
      // Predicated region
      $region17: #{basic_block_forward.4} parent=5 // pred_check
        %p155 = pneg %p154
      $region18: #{basic_block_forward.4} parent=5 // pred_check_branch
        %157 = sbr.rel (%p155) target = $region20
      $region19: #{basic_block_forward.4} parent=5 // pred_region
        // Predicated region
        $region21: #{basic_block_forward.4} parent=19 // pred_check
          %p158 = pneg %p52
        $region22: #{basic_block_forward.4} parent=19 // pred_check_branch
          %160 = sbr.rel (%p158) target = $region24
        $region23: #{basic_block_forward.4} parent=19 // pred_region
          %s161 = sand.u32 %s42, 1
          %s162 = sand.u32 %s42, 1
          %s163 = smul.addr %s162, 864
          %s164 = scalar_lea.vmem [#allocation2], %s163
          %s165 = smul.u32 4, %s11
          %s166 = smul.addr %s165, 4
          %s167 = scalar_lea.vmem %s1, %s166
          // Predicated region
          $region25: #{basic_block_forward.4} parent=23 // pred_check
            _
          $region26: #{basic_block_forward.4} parent=23 // pred_check_branch
            %169 = sbr.rel (0) target = $region28
          $region27: #{basic_block_forward.4} parent=23 // pred_region
            // Predicated region
            $region29: #{basic_block_forward.4} parent=27 // pred_check
              _
            $region30: #{basic_block_forward.4} parent=27 // pred_check_branch
              %171 = sbr.rel (0) target = $region32
            $region31: #{basic_block_forward.4} parent=27 // pred_region
              loop: start=0, step=1, limit=1
              $region33: #{basic_block_forward.4} parent=31 // loop_pre_header
                _
              $region34: #{basic_block_forward.4} parent=31 // loop_header
                %s173 = sphi 0, %s177
                %p174 = scmp.ge.s32.totalorder %s173, 1
                %s178 = sphi %s167, %s167
                %s179 = sphi %s164, %s164
              $region35: #{basic_block_forward.4} parent=31 // loop_header_branch
                %176 = sbr.rel (%p174) target = $region39
              $region36: #{basic_block_forward.4} parent=31 // loop_body
                %v180 = vld [vmem:[%s178] sm:$0xff]
                %181 = vst [vmem:[%s179] sm:$0xff] %v180
                %v182 = vld [vmem:[%s178 + $0x8] sm:$0xff]
                %183 = vst [vmem:[%s179 + $0x8] sm:$0xff] %v182
                %v184 = vld [vmem:[%s178 + $0x20] sm:$0xff]
                %185 = vst [vmem:[%s179 + $0x10] sm:$0xff] %v184
                %v186 = vld [vmem:[%s178 + $0x28] sm:$0xff]
                %187 = vst [vmem:[%s179 + $0x18] sm:$0xff] %v186
                %v188 = vld [vmem:[%s178 + $0x40] sm:$0xff]
                %189 = vst [vmem:[%s179 + $0x20] sm:$0xff] %v188
                %v190 = vld [vmem:[%s178 + $0x48] sm:$0xff]
                %191 = vst [vmem:[%s179 + $0x28] sm:$0xff] %v190
                %v192 = vld [vmem:[%s178 + $0x60] sm:$0xff]
                %193 = vst [vmem:[%s179 + $0x30] sm:$0xff] %v192
                %v194 = vld [vmem:[%s178 + $0x68] sm:$0xff]
                %195 = vst [vmem:[%s179 + $0x38] sm:$0xff] %v194
                %v196 = vld [vmem:[%s178 + $0x80] sm:$0xff]
                %197 = vst [vmem:[%s179 + $0x40] sm:$0xff] %v196
                %v198 = vld [vmem:[%s178 + $0x88] sm:$0xff]
                %199 = vst [vmem:[%s179 + $0x48] sm:$0xff] %v198
                %v200 = vld [vmem:[%s178 + $0xa0] sm:$0xff]
                %201 = vst [vmem:[%s179 + $0x50] sm:$0xff] %v200
                %v202 = vld [vmem:[%s178 + $0xa8] sm:$0xff]
                %203 = vst [vmem:[%s179 + $0x58] sm:$0xff] %v202
                %v204 = vld [vmem:[%s178 + $0xc0] sm:$0xff]
                %205 = vst [vmem:[%s179 + $0x60] sm:$0xff] %v204
                %v206 = vld [vmem:[%s178 + $0xc8] sm:$0xff]
                %207 = vst [vmem:[%s179 + $0x68] sm:$0xff] %v206
                %v208 = vld [vmem:[%s178 + $0xe0] sm:$0xff]
                %209 = vst [vmem:[%s179 + $0x70] sm:$0xff] %v208
                %v210 = vld [vmem:[%s178 + $0xe8] sm:$0xff]
                %211 = vst [vmem:[%s179 + $0x78] sm:$0xff] %v210
                %v212 = vld [vmem:[%s178 + $0x100] sm:$0xff]
                %213 = vst [vmem:[%s179 + $0x80] sm:$0xff] %v212
                %v214 = vld [vmem:[%s178 + $0x108] sm:$0xff]
                %215 = vst [vmem:[%s179 + $0x88] sm:$0xff] %v214
                %v216 = vld [vmem:[%s178 + $0x120] sm:$0xff]
                %217 = vst [vmem:[%s179 + $0x90] sm:$0xff] %v216
                %v218 = vld [vmem:[%s178 + $0x128] sm:$0xff]
                %219 = vst [vmem:[%s179 + $0x98] sm:$0xff] %v218
                %v220 = vld [vmem:[%s178 + $0x140] sm:$0xff]
                %221 = vst [vmem:[%s179 + $0xa0] sm:$0xff] %v220
                %v222 = vld [vmem:[%s178 + $0x148] sm:$0xff]
                %223 = vst [vmem:[%s179 + $0xa8] sm:$0xff] %v222
                %v224 = vld [vmem:[%s178 + $0x160] sm:$0xff]
                %225 = vst [vmem:[%s179 + $0xb0] sm:$0xff] %v224
                %v226 = vld [vmem:[%s178 + $0x168] sm:$0xff]
                %227 = vst [vmem:[%s179 + $0xb8] sm:$0xff] %v226
                %v228 = vld [vmem:[%s178 + $0x180] sm:$0xff]
                %229 = vst [vmem:[%s179 + $0xc0] sm:$0xff] %v228
                %v230 = vld [vmem:[%s178 + $0x188] sm:$0xff]
                %231 = vst [vmem:[%s179 + $0xc8] sm:$0xff] %v230
                %v232 = vld [vmem:[%s178 + $0x1a0] sm:$0xff]
                %233 = vst [vmem:[%s179 + $0xd0] sm:$0xff] %v232
                %v234 = vld [vmem:[%s178 + $0x1a8] sm:$0xff]
                %235 = vst [vmem:[%s179 + $0xd8] sm:$0xff] %v234
                %v236 = vld [vmem:[%s178 + $0x1c0] sm:$0xff]
                %237 = vst [vmem:[%s179 + $0xe0] sm:$0xff] %v236
                %v238 = vld [vmem:[%s178 + $0x1c8] sm:$0xff]
                %239 = vst [vmem:[%s179 + $0xe8] sm:$0xff] %v238
                %v240 = vld [vmem:[%s178 + $0x1e0] sm:$0xff]
                %241 = vst [vmem:[%s179 + $0xf0] sm:$0xff] %v240
                %v242 = vld [vmem:[%s178 + $0x1e8] sm:$0xff]
                %243 = vst [vmem:[%s179 + $0xf8] sm:$0xff] %v242
                %v244 = vld [vmem:[%s178 + $0x200] sm:$0xff]
                %245 = vst [vmem:[%s179 + $0x100] sm:$0xff] %v244
                %v246 = vld [vmem:[%s178 + $0x208] sm:$0xff]
                %247 = vst [vmem:[%s179 + $0x108] sm:$0xff] %v246
                %v248 = vld [vmem:[%s178 + $0x220] sm:$0xff]
                %249 = vst [vmem:[%s179 + $0x110] sm:$0xff] %v248
                %v250 = vld [vmem:[%s178 + $0x228] sm:$0xff]
                %251 = vst [vmem:[%s179 + $0x118] sm:$0xff] %v250
                %v252 = vld [vmem:[%s178 + $0x240] sm:$0xff]
                %253 = vst [vmem:[%s179 + $0x120] sm:$0xff] %v252
                %v254 = vld [vmem:[%s178 + $0x248] sm:$0xff]
                %255 = vst [vmem:[%s179 + $0x128] sm:$0xff] %v254
                %v256 = vld [vmem:[%s178 + $0x260] sm:$0xff]
                %257 = vst [vmem:[%s179 + $0x130] sm:$0xff] %v256
                %v258 = vld [vmem:[%s178 + $0x268] sm:$0xff]
                %259 = vst [vmem:[%s179 + $0x138] sm:$0xff] %v258
                %v260 = vld [vmem:[%s178 + $0x280] sm:$0xff]
                %261 = vst [vmem:[%s179 + $0x140] sm:$0xff] %v260
                %v262 = vld [vmem:[%s178 + $0x288] sm:$0xff]
                %263 = vst [vmem:[%s179 + $0x148] sm:$0xff] %v262
                %v264 = vld [vmem:[%s178 + $0x2a0] sm:$0xff]
                %265 = vst [vmem:[%s179 + $0x150] sm:$0xff] %v264
                %v266 = vld [vmem:[%s178 + $0x2a8] sm:$0xff]
                %267 = vst [vmem:[%s179 + $0x158] sm:$0xff] %v266
                %v268 = vld [vmem:[%s178 + $0x2c0] sm:$0xff]
                %269 = vst [vmem:[%s179 + $0x160] sm:$0xff] %v268
                %v270 = vld [vmem:[%s178 + $0x2c8] sm:$0xff]
                %271 = vst [vmem:[%s179 + $0x168] sm:$0xff] %v270
                %v272 = vld [vmem:[%s178 + $0x2e0] sm:$0xff]
                %273 = vst [vmem:[%s179 + $0x170] sm:$0xff] %v272
                %v274 = vld [vmem:[%s178 + $0x2e8] sm:$0xff]
                %275 = vst [vmem:[%s179 + $0x178] sm:$0xff] %v274
                %v276 = vld [vmem:[%s178 + $0x300] sm:$0xff]
                %277 = vst [vmem:[%s179 + $0x180] sm:$0xff] %v276
                %v278 = vld [vmem:[%s178 + $0x308] sm:$0xff]
                %279 = vst [vmem:[%s179 + $0x188] sm:$0xff] %v278
                %v280 = vld [vmem:[%s178 + $0x320] sm:$0xff]
                %281 = vst [vmem:[%s179 + $0x190] sm:$0xff] %v280
                %v282 = vld [vmem:[%s178 + $0x328] sm:$0xff]
                %283 = vst [vmem:[%s179 + $0x198] sm:$0xff] %v282
                %v284 = vld [vmem:[%s178 + $0x340] sm:$0xff]
                %285 = vst [vmem:[%s179 + $0x1a0] sm:$0xff] %v284
                %v286 = vld [vmem:[%s178 + $0x348] sm:$0xff]
                %287 = vst [vmem:[%s179 + $0x1a8] sm:$0xff] %v286
                %v288 = vld [vmem:[%s178 + $0x360] sm:$0xff]
                %289 = vst [vmem:[%s179 + $0x1b0] sm:$0xff] %v288
                %v290 = vld [vmem:[%s178 + $0x368] sm:$0xff]
                %291 = vst [vmem:[%s179 + $0x1b8] sm:$0xff] %v290
                %v292 = vld [vmem:[%s178 + $0x380] sm:$0xff]
                %293 = vst [vmem:[%s179 + $0x1c0] sm:$0xff] %v292
                %v294 = vld [vmem:[%s178 + $0x388] sm:$0xff]
                %295 = vst [vmem:[%s179 + $0x1c8] sm:$0xff] %v294
                %v296 = vld [vmem:[%s178 + $0x3a0] sm:$0xff]
                %297 = vst [vmem:[%s179 + $0x1d0] sm:$0xff] %v296
                %v298 = vld [vmem:[%s178 + $0x3a8] sm:$0xff]
                %299 = vst [vmem:[%s179 + $0x1d8] sm:$0xff] %v298
                %v300 = vld [vmem:[%s178 + $0x3c0] sm:$0xff]
                %301 = vst [vmem:[%s179 + $0x1e0] sm:$0xff] %v300
                %v302 = vld [vmem:[%s178 + $0x3c8] sm:$0xff]
                %303 = vst [vmem:[%s179 + $0x1e8] sm:$0xff] %v302
                %v304 = vld [vmem:[%s178 + $0x3e0] sm:$0xff]
                %305 = vst [vmem:[%s179 + $0x1f0] sm:$0xff] %v304
                %v306 = vld [vmem:[%s178 + $0x3e8] sm:$0xff]
                %307 = vst [vmem:[%s179 + $0x1f8] sm:$0xff] %v306
                %v308 = vld [vmem:[%s178 + $0x400] sm:$0xff]
                %309 = vst [vmem:[%s179 + $0x200] sm:$0xff] %v308
                %v310 = vld [vmem:[%s178 + $0x408] sm:$0xff]
                %311 = vst [vmem:[%s179 + $0x208] sm:$0xff] %v310
                %v312 = vld [vmem:[%s178 + $0x420] sm:$0xff]
                %313 = vst [vmem:[%s179 + $0x210] sm:$0xff] %v312
                %v314 = vld [vmem:[%s178 + $0x428] sm:$0xff]
                %315 = vst [vmem:[%s179 + $0x218] sm:$0xff] %v314
                %v316 = vld [vmem:[%s178 + $0x440] sm:$0xff]
                %317 = vst [vmem:[%s179 + $0x220] sm:$0xff] %v316
                %v318 = vld [vmem:[%s178 + $0x448] sm:$0xff]
                %319 = vst [vmem:[%s179 + $0x228] sm:$0xff] %v318
                %v320 = vld [vmem:[%s178 + $0x460] sm:$0xff]
                %321 = vst [vmem:[%s179 + $0x230] sm:$0xff] %v320
                %v322 = vld [vmem:[%s178 + $0x468] sm:$0xff]
                %323 = vst [vmem:[%s179 + $0x238] sm:$0xff] %v322
                %v324 = vld [vmem:[%s178 + $0x480] sm:$0xff]
                %325 = vst [vmem:[%s179 + $0x240] sm:$0xff] %v324
                %v326 = vld [vmem:[%s178 + $0x488] sm:$0xff]
                %327 = vst [vmem:[%s179 + $0x248] sm:$0xff] %v326
                %v328 = vld [vmem:[%s178 + $0x4a0] sm:$0xff]
                %329 = vst [vmem:[%s179 + $0x250] sm:$0xff] %v328
                %v330 = vld [vmem:[%s178 + $0x4a8] sm:$0xff]
                %331 = vst [vmem:[%s179 + $0x258] sm:$0xff] %v330
                %v332 = vld [vmem:[%s178 + $0x4c0] sm:$0xff]
                %333 = vst [vmem:[%s179 + $0x260] sm:$0xff] %v332
                %v334 = vld [vmem:[%s178 + $0x4c8] sm:$0xff]
                %335 = vst [vmem:[%s179 + $0x268] sm:$0xff] %v334
                %v336 = vld [vmem:[%s178 + $0x4e0] sm:$0xff]
                %337 = vst [vmem:[%s179 + $0x270] sm:$0xff] %v336
                %v338 = vld [vmem:[%s178 + $0x4e8] sm:$0xff]
                %339 = vst [vmem:[%s179 + $0x278] sm:$0xff] %v338
                %v340 = vld [vmem:[%s178 + $0x500] sm:$0xff]
                %341 = vst [vmem:[%s179 + $0x280] sm:$0xff] %v340
                %v342 = vld [vmem:[%s178 + $0x508] sm:$0xff]
                %343 = vst [vmem:[%s179 + $0x288] sm:$0xff] %v342
                %v344 = vld [vmem:[%s178 + $0x520] sm:$0xff]
                %345 = vst [vmem:[%s179 + $0x290] sm:$0xff] %v344
                %v346 = vld [vmem:[%s178 + $0x528] sm:$0xff]
                %347 = vst [vmem:[%s179 + $0x298] sm:$0xff] %v346
                %v348 = vld [vmem:[%s178 + $0x540] sm:$0xff]
                %349 = vst [vmem:[%s179 + $0x2a0] sm:$0xff] %v348
                %v350 = vld [vmem:[%s178 + $0x548] sm:$0xff]
                %351 = vst [vmem:[%s179 + $0x2a8] sm:$0xff] %v350
                %v352 = vld [vmem:[%s178 + $0x560] sm:$0xff]
                %353 = vst [vmem:[%s179 + $0x2b0] sm:$0xff] %v352
                %v354 = vld [vmem:[%s178 + $0x568] sm:$0xff]
                %355 = vst [vmem:[%s179 + $0x2b8] sm:$0xff] %v354
                %v356 = vld [vmem:[%s178 + $0x580] sm:$0xff]
                %357 = vst [vmem:[%s179 + $0x2c0] sm:$0xff] %v356
                %v358 = vld [vmem:[%s178 + $0x588] sm:$0xff]
                %359 = vst [vmem:[%s179 + $0x2c8] sm:$0xff] %v358
                %v360 = vld [vmem:[%s178 + $0x5a0] sm:$0xff]
                %361 = vst [vmem:[%s179 + $0x2d0] sm:$0xff] %v360
                %v362 = vld [vmem:[%s178 + $0x5a8] sm:$0xff]
                %363 = vst [vmem:[%s179 + $0x2d8] sm:$0xff] %v362
                %v364 = vld [vmem:[%s178 + $0x5c0] sm:$0xff]
                %365 = vst [vmem:[%s179 + $0x2e0] sm:$0xff] %v364
                %v366 = vld [vmem:[%s178 + $0x5c8] sm:$0xff]
                %367 = vst [vmem:[%s179 + $0x2e8] sm:$0xff] %v366
                %v368 = vld [vmem:[%s178 + $0x5e0] sm:$0xff]
                %369 = vst [vmem:[%s179 + $0x2f0] sm:$0xff] %v368
                %v370 = vld [vmem:[%s178 + $0x5e8] sm:$0xff]
                %371 = vst [vmem:[%s179 + $0x2f8] sm:$0xff] %v370
                %v372 = vld [vmem:[%s178 + $0x600] sm:$0xff]
                %373 = vst [vmem:[%s179 + $0x300] sm:$0xff] %v372
                %v374 = vld [vmem:[%s178 + $0x608] sm:$0xff]
                %375 = vst [vmem:[%s179 + $0x308] sm:$0xff] %v374
                %v376 = vld [vmem:[%s178 + $0x620] sm:$0xff]
                %377 = vst [vmem:[%s179 + $0x310] sm:$0xff] %v376
                %v378 = vld [vmem:[%s178 + $0x628] sm:$0xff]
                %379 = vst [vmem:[%s179 + $0x318] sm:$0xff] %v378
                %v380 = vld [vmem:[%s178 + $0x640] sm:$0xff]
                %381 = vst [vmem:[%s179 + $0x320] sm:$0xff] %v380
                %v382 = vld [vmem:[%s178 + $0x648] sm:$0xff]
                %383 = vst [vmem:[%s179 + $0x328] sm:$0xff] %v382
                %v384 = vld [vmem:[%s178 + $0x660] sm:$0xff]
                %385 = vst [vmem:[%s179 + $0x330] sm:$0xff] %v384
                %v386 = vld [vmem:[%s178 + $0x668] sm:$0xff]
                %387 = vst [vmem:[%s179 + $0x338] sm:$0xff] %v386
                %v388 = vld [vmem:[%s178 + $0x680] sm:$0xff]
                %389 = vst [vmem:[%s179 + $0x340] sm:$0xff] %v388
                %v390 = vld [vmem:[%s178 + $0x688] sm:$0xff]
                %391 = vst [vmem:[%s179 + $0x348] sm:$0xff] %v390
                %v392 = vld [vmem:[%s178 + $0x6a0] sm:$0xff]
                %393 = vst [vmem:[%s179 + $0x350] sm:$0xff] %v392
                %v394 = vld [vmem:[%s178 + $0x6a8] sm:$0xff]
                %395 = vst [vmem:[%s179 + $0x358] sm:$0xff] %v394
              $region37: #{basic_block_forward.4} parent=31 // loop_footer
                %s177 = sadd.s32 1, %s173
              $region38: #{basic_block_forward.4} parent=31 // loop_footer_branch
                %172 = sbr.rel target = $region34
              $region39: #{basic_block_forward.4} parent=31 // loop_exit
                _
            $region32: #{basic_block_forward.4} parent=27 // pred_fallthru
              _
            // Predicated region
            $region40: #{basic_block_forward.4} parent=27 // pred_check
              _
            $region41: #{basic_block_forward.4} parent=27 // pred_check_branch
              %397 = sbr.rel target = $region43
            $region42: #{basic_block_forward.4} parent=27 // pred_region
              _
            $region43: #{basic_block_forward.4} parent=27 // pred_fallthru
              _
          $region28: #{basic_block_forward.4} parent=23 // pred_fallthru
            _
          %398 = vnop
        $region24: #{basic_block_forward.4} parent=19 // pred_fallthru
          _
      $region20: #{basic_block_forward.4} parent=5 // pred_fallthru
        _
      %p399 = scmp.le.s32.totalorder 1, %s11
      %p400 = scmp.lt.s32.totalorder %s11, 3
      %p401 = pnand %p399, %p400
      %p402 = pneg %p401
      // Predicated region
      $region44: #{basic_block_forward.4} parent=5 // pred_check
        _
      $region45: #{basic_block_forward.4} parent=5 // pred_check_branch
        %404 = sbr.rel (%p401) target = $region47
      $region46: #{basic_block_forward.4} parent=5 // pred_region
        %s405 = ssub.s32 %s11, 1
        %s406 = sand.u32 %s45, 1
        %s407 = sand.u32 %s45, 1
        %s408 = smul.addr %s407, 864
        %s409 = scalar_lea.vmem [#allocation2], %s408
        // Predicated region
        $region48: #{basic_block_forward.4} parent=46 // pred_check
          %p410 = pneg %p58
        $region49: #{basic_block_forward.4} parent=46 // pred_check_branch
          %412 = sbr.rel (%p410) target = $region51
        $region50: #{basic_block_forward.4} parent=46 // pred_region
          _
        $region51: #{basic_block_forward.4} parent=46 // pred_fallthru
          _
        %p413 = pneg %p32
        %p414 = pneg %p29
        %s415 = sand.u32 %s45, 1
        %s416 = sand.u32 %s45, 1
        %s417 = smul.addr %s416, 864
        %s418 = scalar_lea.vmem [#allocation2], %s417
        %p419 = pneg %p58
        %p420 = pneg %p55
        %p421 = pneg %p84
        %p422 = pneg %p81
        %s423 = sand.u32 %s71, 1
        %s424 = sand.u32 %s71, 1
        %s425 = smul.addr %s424, 64
        %s426 = scalar_lea.vmem [#allocation3], %s425
        %p427 = pneg %p110
        %p428 = pneg %p107
        %p429 = scmp.lt.s32.totalorder %s16, 1
        %s430 = scalar_select %p429, %s16, 1
        %s431 = smul.addr %s430, 2
        %s432 = smul.addr %s431, 8
        %s433 = scalar_lea.vmem %s3, %s432
        %p434 = pneg %p136
        %p435 = pneg %p133
        %p436 = scmp.lt.s32.totalorder %s16, 1
        %s437 = scalar_select %p436, %s16, 1
        %s438 = smul.addr %s437, 2
        %s439 = smul.addr %s438, 8
        %s440 = scalar_lea.vmem %s4, %s439
        %s441 = smul.u32 4, %s16
        %s442 = smul.u32 4, %s16
        %p443 = scmp.lt.s32.totalorder %s16, 1
        %s444 = scalar_select %p443, %s16, 1
        %s445 = smul.addr %s444, 2
        %s446 = smul.addr %s445, 8
        %s447 = scalar_lea.vmem %s3, %s446
        %p448 = scmp.lt.s32.totalorder %s16, 1
        %s449 = scalar_select %p448, %s16, 1
        %s450 = smul.addr %s449, 2
        %s451 = smul.addr %s450, 8
        %s452 = scalar_lea.vmem %s4, %s451
        %v454 = vld [vmem:[%s0] sm:$0xff]
        %v455 = vld [vmem:[%s0 + $0x8] sm:$0xff]
        %v456 = vld [vmem:[%s0 + $0x10] sm:$0xff]
        %v457 = vld [vmem:[%s0 + $0x18] sm:$0xff]
        %v458 = vld [vmem:[%s409] sm:$0xff]
        %v459 = vld [vmem:[%s409 + $0x8] sm:$0xff]
        %v460 = vld [vmem:[%s409 + $0x10] sm:$0xff]
        %v461 = vld [vmem:[%s409 + $0x18] sm:$0xff]
        %v462 = vld [vmem:[%s409 + $0x20] sm:$0xff]
        %v463 = vld [vmem:[%s409 + $0x28] sm:$0xff]
        %v464 = vld [vmem:[%s409 + $0x30] sm:$0xff]
        %v465 = vld [vmem:[%s409 + $0x38] sm:$0xff]
        %v466 = vld [vmem:[%s409 + $0x40] sm:$0xff]
        %v467 = vld [vmem:[%s409 + $0x48] sm:$0xff]
        %v468 = vld [vmem:[%s409 + $0x50] sm:$0xff]
        %v469 = vld [vmem:[%s409 + $0x58] sm:$0xff]
        %v470 = vld [vmem:[%s409 + $0x60] sm:$0xff]
        %v471 = vld [vmem:[%s409 + $0x68] sm:$0xff]
        %v472 = vld [vmem:[%s409 + $0x70] sm:$0xff]
        %v473 = vld [vmem:[%s409 + $0x78] sm:$0xff]
        %v474 = vld [vmem:[%s409 + $0x80] sm:$0xff]
        %v475 = vld [vmem:[%s409 + $0x88] sm:$0xff]
        %v476 = vld [vmem:[%s409 + $0x90] sm:$0xff]
        %v477 = vld [vmem:[%s409 + $0x98] sm:$0xff]
        %v478 = vld [vmem:[%s409 + $0xa0] sm:$0xff]
        %v479 = vld [vmem:[%s409 + $0xa8] sm:$0xff]
        %v480 = vld [vmem:[%s409 + $0xb0] sm:$0xff]
        %v481 = vld [vmem:[%s409 + $0xb8] sm:$0xff]
        %v482 = vld [vmem:[%s409 + $0xc0] sm:$0xff]
        %v483 = vld [vmem:[%s409 + $0xc8] sm:$0xff]
        %v484 = vld [vmem:[%s409 + $0xd0] sm:$0xff]
        %v485 = vld [vmem:[%s409 + $0xd8] sm:$0xff]
        %v486 = vld [vmem:[%s409 + $0xe0] sm:$0xff]
        %v487 = vld [vmem:[%s409 + $0xe8] sm:$0xff]
        %v488 = vld [vmem:[%s409 + $0xf0] sm:$0xff]
        %v489 = vld [vmem:[%s409 + $0xf8] sm:$0xff]
        %v490 = vld [vmem:[%s409 + $0x100] sm:$0xff]
        %v491 = vld [vmem:[%s409 + $0x108] sm:$0xff]
        %v492 = vld [vmem:[%s409 + $0x110] sm:$0xff]
        %v493 = vld [vmem:[%s409 + $0x118] sm:$0xff]
        %v494 = vld [vmem:[%s409 + $0x120] sm:$0xff]
        %v495 = vld [vmem:[%s409 + $0x128] sm:$0xff]
        %v496 = vld [vmem:[%s409 + $0x130] sm:$0xff]
        %v497 = vld [vmem:[%s409 + $0x138] sm:$0xff]
        %v498 = vld [vmem:[%s409 + $0x140] sm:$0xff]
        %v499 = vld [vmem:[%s409 + $0x148] sm:$0xff]
        %v500 = vld [vmem:[%s409 + $0x150] sm:$0xff]
        %v501 = vld [vmem:[%s409 + $0x158] sm:$0xff]
        %v502 = vld [vmem:[%s409 + $0x160] sm:$0xff]
        %v503 = vld [vmem:[%s409 + $0x168] sm:$0xff]
        %v504 = vld [vmem:[%s409 + $0x170] sm:$0xff]
        %v505 = vld [vmem:[%s409 + $0x178] sm:$0xff]
        %v506 = vld [vmem:[%s409 + $0x180] sm:$0xff]
        %v507 = vld [vmem:[%s409 + $0x188] sm:$0xff]
        %v508 = vld [vmem:[%s409 + $0x190] sm:$0xff]
        %v509 = vld [vmem:[%s409 + $0x198] sm:$0xff]
        %v510 = vld [vmem:[%s409 + $0x1a0] sm:$0xff]
        %v511 = vld [vmem:[%s409 + $0x1a8] sm:$0xff]
        %v512 = vld [vmem:[%s409 + $0x1b0] sm:$0xff]
        %v513 = vld [vmem:[%s409 + $0x1b8] sm:$0xff]
        %v514 = vld [vmem:[%s409 + $0x1c0] sm:$0xff]
        %v515 = vld [vmem:[%s409 + $0x1c8] sm:$0xff]
        %v516 = vld [vmem:[%s409 + $0x1d0] sm:$0xff]
        %v517 = vld [vmem:[%s409 + $0x1d8] sm:$0xff]
        %v518 = vld [vmem:[%s409 + $0x1e0] sm:$0xff]
        %v519 = vld [vmem:[%s409 + $0x1e8] sm:$0xff]
        %v520 = vld [vmem:[%s409 + $0x1f0] sm:$0xff]
        %v521 = vld [vmem:[%s409 + $0x1f8] sm:$0xff]
        %v522 = vld [vmem:[%s409 + $0x200] sm:$0xff]
        %v523 = vld [vmem:[%s409 + $0x208] sm:$0xff]
        %v524 = vld [vmem:[%s409 + $0x210] sm:$0xff]
        %v525 = vld [vmem:[%s409 + $0x218] sm:$0xff]
        %v526 = vld [vmem:[%s409 + $0x220] sm:$0xff]
        %v527 = vld [vmem:[%s409 + $0x228] sm:$0xff]
        %v528 = vld [vmem:[%s409 + $0x230] sm:$0xff]
        %v529 = vld [vmem:[%s409 + $0x238] sm:$0xff]
        %v530 = vld [vmem:[%s409 + $0x240] sm:$0xff]
        %v531 = vld [vmem:[%s409 + $0x248] sm:$0xff]
        %v532 = vld [vmem:[%s409 + $0x250] sm:$0xff]
        %v533 = vld [vmem:[%s409 + $0x258] sm:$0xff]
        %v534 = vld [vmem:[%s409 + $0x260] sm:$0xff]
        %v535 = vld [vmem:[%s409 + $0x268] sm:$0xff]
        %v536 = vld [vmem:[%s409 + $0x270] sm:$0xff]
        %v537 = vld [vmem:[%s409 + $0x278] sm:$0xff]
        %v538 = vld [vmem:[%s409 + $0x280] sm:$0xff]
        %v539 = vld [vmem:[%s409 + $0x288] sm:$0xff]
        %v540 = vld [vmem:[%s409 + $0x290] sm:$0xff]
        %v541 = vld [vmem:[%s409 + $0x298] sm:$0xff]
        %v542 = vld [vmem:[%s409 + $0x2a0] sm:$0xff]
        %v543 = vld [vmem:[%s409 + $0x2a8] sm:$0xff]
        %v544 = vld [vmem:[%s409 + $0x2b0] sm:$0xff]
        %v545 = vld [vmem:[%s409 + $0x2b8] sm:$0xff]
        %v546 = vld [vmem:[%s409 + $0x2c0] sm:$0xff]
        %v547 = vld [vmem:[%s409 + $0x2c8] sm:$0xff]
        %v548 = vld [vmem:[%s409 + $0x2d0] sm:$0xff]
        %v549 = vld [vmem:[%s409 + $0x2d8] sm:$0xff]
        %v550 = vld [vmem:[%s409 + $0x2e0] sm:$0xff]
        %v551 = vld [vmem:[%s409 + $0x2e8] sm:$0xff]
        %v552 = vld [vmem:[%s409 + $0x2f0] sm:$0xff]
        %v553 = vld [vmem:[%s409 + $0x2f8] sm:$0xff]
        %v554 = vld [vmem:[%s409 + $0x300] sm:$0xff]
        %v555 = vld [vmem:[%s409 + $0x308] sm:$0xff]
        %v556 = vld [vmem:[%s409 + $0x310] sm:$0xff]
        %v557 = vld [vmem:[%s409 + $0x318] sm:$0xff]
        %v558 = vld [vmem:[%s409 + $0x320] sm:$0xff]
        %v559 = vld [vmem:[%s409 + $0x328] sm:$0xff]
        %v560 = vld [vmem:[%s409 + $0x330] sm:$0xff]
        %v561 = vld [vmem:[%s409 + $0x338] sm:$0xff]
        %v562 = vld [vmem:[%s409 + $0x340] sm:$0xff]
        %v563 = vld [vmem:[%s409 + $0x348] sm:$0xff]
        %v564 = vld [vmem:[%s409 + $0x350] sm:$0xff]
        %v565 = vld [vmem:[%s409 + $0x358] sm:$0xff]
        %v570 = vunpack.c.l.b16 %v454
        %v571 = vunpack.c.h.b16 %v454
        %v572 = vunpack.c.l.b16 %v455
        %v573 = vunpack.c.h.b16 %v455
        %v574 = vunpack.c.l.b16 %v456
        %v575 = vunpack.c.h.b16 %v456
        %v576 = vunpack.c.l.b16 %v457
        %v577 = vunpack.c.h.b16 %v457
        %v578 = vpack.c.b16 %v574, %v570
        %v579 = vpack.c.b16 %v575, %v571
        %v580 = vpack.c.b16 %v576, %v572
        %v581 = vpack.c.b16 %v577, %v573
        %v693 = vunpack.c.l.b16 %v458
        %v694 = vunpack.c.h.b16 %v458
        %v695 = vunpack.c.l.b16 %v459
        %v696 = vunpack.c.h.b16 %v459
        %v697 = vunpack.c.l.b16 %v460
        %v698 = vunpack.c.h.b16 %v460
        %v699 = vunpack.c.l.b16 %v461
        %v700 = vunpack.c.h.b16 %v461
        %v701 = vunpack.c.l.b16 %v462
        %v702 = vunpack.c.h.b16 %v462
        %v703 = vunpack.c.l.b16 %v463
        %v704 = vunpack.c.h.b16 %v463
        %v705 = vunpack.c.l.b16 %v464
        %v706 = vunpack.c.h.b16 %v464
        %v707 = vunpack.c.l.b16 %v465
        %v708 = vunpack.c.h.b16 %v465
        %v709 = vunpack.c.l.b16 %v466
        %v710 = vunpack.c.h.b16 %v466
        %v711 = vunpack.c.l.b16 %v467
        %v712 = vunpack.c.h.b16 %v467
        %v713 = vunpack.c.l.b16 %v468
        %v714 = vunpack.c.h.b16 %v468
        %v715 = vunpack.c.l.b16 %v469
        %v716 = vunpack.c.h.b16 %v469
        %v717 = vunpack.c.l.b16 %v470
        %v718 = vunpack.c.h.b16 %v470
        %v719 = vunpack.c.l.b16 %v471
        %v720 = vunpack.c.h.b16 %v471
        %v721 = vunpack.c.l.b16 %v472
        %v722 = vunpack.c.h.b16 %v472
        %v723 = vunpack.c.l.b16 %v473
        %v724 = vunpack.c.h.b16 %v473
        %v725 = vunpack.c.l.b16 %v474
        %v726 = vunpack.c.h.b16 %v474
        %v727 = vunpack.c.l.b16 %v475
        %v728 = vunpack.c.h.b16 %v475
        %v729 = vunpack.c.l.b16 %v476
        %v730 = vunpack.c.h.b16 %v476
        %v731 = vunpack.c.l.b16 %v477
        %v732 = vunpack.c.h.b16 %v477
        %v733 = vunpack.c.l.b16 %v478
        %v734 = vunpack.c.h.b16 %v478
        %v735 = vunpack.c.l.b16 %v479
        %v736 = vunpack.c.h.b16 %v479
        %v737 = vunpack.c.l.b16 %v480
        %v738 = vunpack.c.h.b16 %v480
        %v739 = vunpack.c.l.b16 %v481
        %v740 = vunpack.c.h.b16 %v481
        %v741 = vunpack.c.l.b16 %v482
        %v742 = vunpack.c.h.b16 %v482
        %v743 = vunpack.c.l.b16 %v483
        %v744 = vunpack.c.h.b16 %v483
        %v745 = vunpack.c.l.b16 %v484
        %v746 = vunpack.c.h.b16 %v484
        %v747 = vunpack.c.l.b16 %v485
        %v748 = vunpack.c.h.b16 %v485
        %v749 = vunpack.c.l.b16 %v486
        %v750 = vunpack.c.h.b16 %v486
        %v751 = vunpack.c.l.b16 %v487
        %v752 = vunpack.c.h.b16 %v487
        %v753 = vunpack.c.l.b16 %v488
        %v754 = vunpack.c.h.b16 %v488
        %v755 = vunpack.c.l.b16 %v489
        %v756 = vunpack.c.h.b16 %v489
        %v757 = vunpack.c.l.b16 %v490
        %v758 = vunpack.c.h.b16 %v490
        %v759 = vunpack.c.l.b16 %v491
        %v760 = vunpack.c.h.b16 %v491
        %v761 = vunpack.c.l.b16 %v492
        %v762 = vunpack.c.h.b16 %v492
        %v763 = vunpack.c.l.b16 %v493
        %v764 = vunpack.c.h.b16 %v493
        %v765 = vunpack.c.l.b16 %v494
        %v766 = vunpack.c.h.b16 %v494
        %v767 = vunpack.c.l.b16 %v495
        %v768 = vunpack.c.h.b16 %v495
        %v769 = vunpack.c.l.b16 %v496
        %v770 = vunpack.c.h.b16 %v496
        %v771 = vunpack.c.l.b16 %v497
        %v772 = vunpack.c.h.b16 %v497
        %v773 = vunpack.c.l.b16 %v498
        %v774 = vunpack.c.h.b16 %v498
        %v775 = vunpack.c.l.b16 %v499
        %v776 = vunpack.c.h.b16 %v499
        %v777 = vunpack.c.l.b16 %v500
        %v778 = vunpack.c.h.b16 %v500
        %v779 = vunpack.c.l.b16 %v501
        %v780 = vunpack.c.h.b16 %v501
        %v781 = vunpack.c.l.b16 %v502
        %v782 = vunpack.c.h.b16 %v502
        %v783 = vunpack.c.l.b16 %v503
        %v784 = vunpack.c.h.b16 %v503
        %v785 = vunpack.c.l.b16 %v504
        %v786 = vunpack.c.h.b16 %v504
        %v787 = vunpack.c.l.b16 %v505
        %v788 = vunpack.c.h.b16 %v505
        %v789 = vunpack.c.l.b16 %v506
        %v790 = vunpack.c.h.b16 %v506
        %v791 = vunpack.c.l.b16 %v507
        %v792 = vunpack.c.h.b16 %v507
        %v793 = vunpack.c.l.b16 %v508
        %v794 = vunpack.c.h.b16 %v508
        %v795 = vunpack.c.l.b16 %v509
        %v796 = vunpack.c.h.b16 %v509
        %v797 = vunpack.c.l.b16 %v510
        %v798 = vunpack.c.h.b16 %v510
        %v799 = vunpack.c.l.b16 %v511
        %v800 = vunpack.c.h.b16 %v511
        %v801 = vunpack.c.l.b16 %v512
        %v802 = vunpack.c.h.b16 %v512
        %v803 = vunpack.c.l.b16 %v513
        %v804 = vunpack.c.h.b16 %v513
        %v805 = vunpack.c.l.b16 %v514
        %v806 = vunpack.c.h.b16 %v514
        %v807 = vunpack.c.l.b16 %v515
        %v808 = vunpack.c.h.b16 %v515
        %v809 = vunpack.c.l.b16 %v516
        %v810 = vunpack.c.h.b16 %v516
        %v811 = vunpack.c.l.b16 %v517
        %v812 = vunpack.c.h.b16 %v517
        %v813 = vunpack.c.l.b16 %v518
        %v814 = vunpack.c.h.b16 %v518
        %v815 = vunpack.c.l.b16 %v519
        %v816 = vunpack.c.h.b16 %v519
        %v817 = vunpack.c.l.b16 %v520
        %v818 = vunpack.c.h.b16 %v520
        %v819 = vunpack.c.l.b16 %v521
        %v820 = vunpack.c.h.b16 %v521
        %v821 = vunpack.c.l.b16 %v522
        %v822 = vunpack.c.h.b16 %v522
        %v823 = vunpack.c.l.b16 %v523
        %v824 = vunpack.c.h.b16 %v523
        %v825 = vunpack.c.l.b16 %v524
        %v826 = vunpack.c.h.b16 %v524
        %v827 = vunpack.c.l.b16 %v525
        %v828 = vunpack.c.h.b16 %v525
        %v829 = vunpack.c.l.b16 %v526
        %v830 = vunpack.c.h.b16 %v526
        %v831 = vunpack.c.l.b16 %v527
        %v832 = vunpack.c.h.b16 %v527
        %v833 = vunpack.c.l.b16 %v528
        %v834 = vunpack.c.h.b16 %v528
        %v835 = vunpack.c.l.b16 %v529
        %v836 = vunpack.c.h.b16 %v529
        %v837 = vunpack.c.l.b16 %v530
        %v838 = vunpack.c.h.b16 %v530
        %v839 = vunpack.c.l.b16 %v531
        %v840 = vunpack.c.h.b16 %v531
        %v841 = vunpack.c.l.b16 %v532
        %v842 = vunpack.c.h.b16 %v532
        %v843 = vunpack.c.l.b16 %v533
        %v844 = vunpack.c.h.b16 %v533
        %v845 = vunpack.c.l.b16 %v534
        %v846 = vunpack.c.h.b16 %v534
        %v847 = vunpack.c.l.b16 %v535
        %v848 = vunpack.c.h.b16 %v535
        %v849 = vunpack.c.l.b16 %v536
        %v850 = vunpack.c.h.b16 %v536
        %v851 = vunpack.c.l.b16 %v537
        %v852 = vunpack.c.h.b16 %v537
        %v853 = vunpack.c.l.b16 %v538
        %v854 = vunpack.c.h.b16 %v538
        %v855 = vunpack.c.l.b16 %v539
        %v856 = vunpack.c.h.b16 %v539
        %v857 = vunpack.c.l.b16 %v540
        %v858 = vunpack.c.h.b16 %v540
        %v859 = vunpack.c.l.b16 %v541
        %v860 = vunpack.c.h.b16 %v541
        %v861 = vunpack.c.l.b16 %v542
        %v862 = vunpack.c.h.b16 %v542
        %v863 = vunpack.c.l.b16 %v543
        %v864 = vunpack.c.h.b16 %v543
        %v865 = vunpack.c.l.b16 %v544
        %v866 = vunpack.c.h.b16 %v544
        %v867 = vunpack.c.l.b16 %v545
        %v868 = vunpack.c.h.b16 %v545
        %v869 = vunpack.c.l.b16 %v546
        %v870 = vunpack.c.h.b16 %v546
        %v871 = vunpack.c.l.b16 %v547
        %v872 = vunpack.c.h.b16 %v547
        %v873 = vunpack.c.l.b16 %v548
        %v874 = vunpack.c.h.b16 %v548
        %v875 = vunpack.c.l.b16 %v549
        %v876 = vunpack.c.h.b16 %v549
        %v877 = vunpack.c.l.b16 %v550
        %v878 = vunpack.c.h.b16 %v550
        %v879 = vunpack.c.l.b16 %v551
        %v880 = vunpack.c.h.b16 %v551
        %v881 = vunpack.c.l.b16 %v552
        %v882 = vunpack.c.h.b16 %v552
        %v883 = vunpack.c.l.b16 %v553
        %v884 = vunpack.c.h.b16 %v553
        %v885 = vunpack.c.l.b16 %v554
        %v886 = vunpack.c.h.b16 %v554
        %v887 = vunpack.c.l.b16 %v555
        %v888 = vunpack.c.h.b16 %v555
        %v889 = vunpack.c.l.b16 %v556
        %v890 = vunpack.c.h.b16 %v556
        %v891 = vunpack.c.l.b16 %v557
        %v892 = vunpack.c.h.b16 %v557
        %v893 = vunpack.c.l.b16 %v558
        %v894 = vunpack.c.h.b16 %v558
        %v895 = vunpack.c.l.b16 %v559
        %v896 = vunpack.c.h.b16 %v559
        %v897 = vunpack.c.l.b16 %v560
        %v898 = vunpack.c.h.b16 %v560
        %v899 = vunpack.c.l.b16 %v561
        %v900 = vunpack.c.h.b16 %v561
        %v901 = vunpack.c.l.b16 %v562
        %v902 = vunpack.c.h.b16 %v562
        %v903 = vunpack.c.l.b16 %v563
        %v904 = vunpack.c.h.b16 %v563
        %v905 = vunpack.c.l.b16 %v564
        %v906 = vunpack.c.h.b16 %v564
        %v907 = vunpack.c.l.b16 %v565
        %v908 = vunpack.c.h.b16 %v565
        %v909 = vpack.c.b16 %v697, %v693
        %v910 = vpack.c.b16 %v698, %v694
        %v911 = vpack.c.b16 %v699, %v695
        %v912 = vpack.c.b16 %v700, %v696
        %v913 = vpack.c.b16 %v705, %v701
        %v914 = vpack.c.b16 %v706, %v702
        %v915 = vpack.c.b16 %v707, %v703
        %v916 = vpack.c.b16 %v708, %v704
        %v917 = vpack.c.b16 %v713, %v709
        %v918 = vpack.c.b16 %v714, %v710
        %v919 = vpack.c.b16 %v715, %v711
        %v920 = vpack.c.b16 %v716, %v712
        %v921 = vpack.c.b16 %v721, %v717
        %v922 = vpack.c.b16 %v722, %v718
        %v923 = vpack.c.b16 %v723, %v719
        %v924 = vpack.c.b16 %v724, %v720
        %v925 = vpack.c.b16 %v729, %v725
        %v926 = vpack.c.b16 %v730, %v726
        %v927 = vpack.c.b16 %v731, %v727
        %v928 = vpack.c.b16 %v732, %v728
        %v929 = vpack.c.b16 %v737, %v733
        %v930 = vpack.c.b16 %v738, %v734
        %v931 = vpack.c.b16 %v739, %v735
        %v932 = vpack.c.b16 %v740, %v736
        %v933 = vpack.c.b16 %v745, %v741
        %v934 = vpack.c.b16 %v746, %v742
        %v935 = vpack.c.b16 %v747, %v743
        %v936 = vpack.c.b16 %v748, %v744
        %v937 = vpack.c.b16 %v753, %v749
        %v938 = vpack.c.b16 %v754, %v750
        %v939 = vpack.c.b16 %v755, %v751
        %v940 = vpack.c.b16 %v756, %v752
        %v941 = vpack.c.b16 %v761, %v757
        %v942 = vpack.c.b16 %v762, %v758
        %v943 = vpack.c.b16 %v763, %v759
        %v944 = vpack.c.b16 %v764, %v760
        %v945 = vpack.c.b16 %v769, %v765
        %v946 = vpack.c.b16 %v770, %v766
        %v947 = vpack.c.b16 %v771, %v767
        %v948 = vpack.c.b16 %v772, %v768
        %v949 = vpack.c.b16 %v777, %v773
        %v950 = vpack.c.b16 %v778, %v774
        %v951 = vpack.c.b16 %v779, %v775
        %v952 = vpack.c.b16 %v780, %v776
        %v953 = vpack.c.b16 %v785, %v781
        %v954 = vpack.c.b16 %v786, %v782
        %v955 = vpack.c.b16 %v787, %v783
        %v956 = vpack.c.b16 %v788, %v784
        %v957 = vpack.c.b16 %v793, %v789
        %v958 = vpack.c.b16 %v794, %v790
        %v959 = vpack.c.b16 %v795, %v791
        %v960 = vpack.c.b16 %v796, %v792
        %v961 = vpack.c.b16 %v801, %v797
        %v962 = vpack.c.b16 %v802, %v798
        %v963 = vpack.c.b16 %v803, %v799
        %v964 = vpack.c.b16 %v804, %v800
        %v965 = vpack.c.b16 %v809, %v805
        %v966 = vpack.c.b16 %v810, %v806
        %v967 = vpack.c.b16 %v811, %v807
        %v968 = vpack.c.b16 %v812, %v808
        %v969 = vpack.c.b16 %v817, %v813
        %v970 = vpack.c.b16 %v818, %v814
        %v971 = vpack.c.b16 %v819, %v815
        %v972 = vpack.c.b16 %v820, %v816
        %v973 = vpack.c.b16 %v825, %v821
        %v974 = vpack.c.b16 %v826, %v822
        %v975 = vpack.c.b16 %v827, %v823
        %v976 = vpack.c.b16 %v828, %v824
        %v977 = vpack.c.b16 %v833, %v829
        %v978 = vpack.c.b16 %v834, %v830
        %v979 = vpack.c.b16 %v835, %v831
        %v980 = vpack.c.b16 %v836, %v832
        %v981 = vpack.c.b16 %v841, %v837
        %v982 = vpack.c.b16 %v842, %v838
        %v983 = vpack.c.b16 %v843, %v839
        %v984 = vpack.c.b16 %v844, %v840
        %v985 = vpack.c.b16 %v849, %v845
        %v986 = vpack.c.b16 %v850, %v846
        %v987 = vpack.c.b16 %v851, %v847
        %v988 = vpack.c.b16 %v852, %v848
        %v989 = vpack.c.b16 %v857, %v853
        %v990 = vpack.c.b16 %v858, %v854
        %v991 = vpack.c.b16 %v859, %v855
        %v992 = vpack.c.b16 %v860, %v856
        %v993 = vpack.c.b16 %v865, %v861
        %v994 = vpack.c.b16 %v866, %v862
        %v995 = vpack.c.b16 %v867, %v863
        %v996 = vpack.c.b16 %v868, %v864
        %v997 = vpack.c.b16 %v873, %v869
        %v998 = vpack.c.b16 %v874, %v870
        %v999 = vpack.c.b16 %v875, %v871
        %v1000 = vpack.c.b16 %v876, %v872
        %v1001 = vpack.c.b16 %v881, %v877
        %v1002 = vpack.c.b16 %v882, %v878
        %v1003 = vpack.c.b16 %v883, %v879
        %v1004 = vpack.c.b16 %v884, %v880
        %v1005 = vpack.c.b16 %v889, %v885
        %v1006 = vpack.c.b16 %v890, %v886
        %v1007 = vpack.c.b16 %v891, %v887
        %v1008 = vpack.c.b16 %v892, %v888
        %v1009 = vpack.c.b16 %v897, %v893
        %v1010 = vpack.c.b16 %v898, %v894
        %v1011 = vpack.c.b16 %v899, %v895
        %v1012 = vpack.c.b16 %v900, %v896
        %v1013 = vpack.c.b16 %v905, %v901
        %v1014 = vpack.c.b16 %v906, %v902
        %v1015 = vpack.c.b16 %v907, %v903
        %v1016 = vpack.c.b16 %v908, %v904
        %vm1125 = vcmask 392192
        %v1127 = vsel %vm1125, %v581, 0
        %1129 = vmatpush.bf16.msra.mxu0 %v937
        %1130 = vmatpush.bf16.msra.mxu0 %v933
        %1131 = vmatpush.bf16.msra.mxu0 %v929
        %1132 = vmatpush.bf16.msra.mxu0 %v925
        %1133 = vmatpush.bf16.msra.mxu0 %v921
        %1134 = vmatpush.bf16.msra.mxu0 %v917
        %1135 = vmatpush.bf16.msra.mxu0 %v913
        %1136 = vmatpush.bf16.msra.mxu0 %v909
        %1137 = vmatmul.bf16.gmra.mxu0 %v578
        %v1138 = vpop.f32.mrf.mxu0
        %v1139 = vadd.f32 0.0, %v1138
        %v1140 = vpop.f32.mrf.mxu0
        %v1141 = vadd.f32 0.0, %v1140
        %1142 = vdwg.mxu0
        %1143 = vmatpush.bf16.msra.mxu0 %v969
        %1144 = vmatpush.bf16.msra.mxu0 %v965
        %1145 = vmatpush.bf16.msra.mxu0 %v961
        %1146 = vmatpush.bf16.msra.mxu0 %v957
        %1147 = vmatpush.bf16.msra.mxu0 %v953
        %1148 = vmatpush.bf16.msra.mxu0 %v949
        %1149 = vmatpush.bf16.msra.mxu0 %v945
        %1150 = vmatpush.bf16.msra.mxu0 %v941
        %1151 = vmatmul.bf16.gmra.mxu0 %v579
        %v1152 = vpop.f32.mrf.mxu0
        %v1153 = vadd.f32 %v1139, %v1152
        %v1154 = vpop.f32.mrf.mxu0
        %v1155 = vadd.f32 %v1141, %v1154
        %1156 = vdwg.mxu0
        %1157 = vmatpush.bf16.msra.mxu0 %v1001
        %1158 = vmatpush.bf16.msra.mxu0 %v997
        %1159 = vmatpush.bf16.msra.mxu0 %v993
        %1160 = vmatpush.bf16.msra.mxu0 %v989
        %1161 = vmatpush.bf16.msra.mxu0 %v985
        %1162 = vmatpush.bf16.msra.mxu0 %v981
        %1163 = vmatpush.bf16.msra.mxu0 %v977
        %1164 = vmatpush.bf16.msra.mxu0 %v973
        %1165 = vmatmul.bf16.gmra.mxu0 %v580
        %v1166 = vpop.f32.mrf.mxu0
        %v1167 = vadd.f32 %v1153, %v1166
        %v1168 = vpop.f32.mrf.mxu0
        %v1169 = vadd.f32 %v1155, %v1168
        %1170 = vdwg.mxu0
        %1171 = vmatpush.bf16.msra.mxu0 0
        %1172 = vmatpush.bf16.msra.mxu0 0
        %1173 = vmatpush.bf16.msra.mxu0 0
        %1174 = vmatpush.bf16.msra.mxu0 0
        %1175 = vmatpush.bf16.msra.mxu0 0
        %1176 = vmatpush.bf16.msra.mxu0 %v1013
        %1177 = vmatpush.bf16.msra.mxu0 %v1009
        %1178 = vmatpush.bf16.msra.mxu0 %v1005
        %1179 = vmatmul.bf16.gmra.mxu0 %v1127
        %v1180 = vpop.f32.mrf.mxu0
        %v1181 = vadd.f32 %v1167, %v1180
        %v1182 = vpop.f32.mrf.mxu0
        %v1183 = vadd.f32 %v1169, %v1182
        %1184 = vdwg.mxu0
        %1185 = vmatpush.bf16.msra.mxu0 %v938
        %1186 = vmatpush.bf16.msra.mxu0 %v934
        %1187 = vmatpush.bf16.msra.mxu0 %v930
        %1188 = vmatpush.bf16.msra.mxu0 %v926
        %1189 = vmatpush.bf16.msra.mxu0 %v922
        %1190 = vmatpush.bf16.msra.mxu0 %v918
        %1191 = vmatpush.bf16.msra.mxu0 %v914
        %1192 = vmatpush.bf16.msra.mxu0 %v910
        %1193 = vmatmul.bf16.gmra.mxu0 %v578
        %v1194 = vpop.f32.mrf.mxu0
        %v1195 = vadd.f32 0.0, %v1194
        %v1196 = vpop.f32.mrf.mxu0
        %v1197 = vadd.f32 0.0, %v1196
        %1198 = vdwg.mxu0
        %1199 = vmatpush.bf16.msra.mxu0 %v970
        %1200 = vmatpush.bf16.msra.mxu0 %v966
        %1201 = vmatpush.bf16.msra.mxu0 %v962
        %1202 = vmatpush.bf16.msra.mxu0 %v958
        %1203 = vmatpush.bf16.msra.mxu0 %v954
        %1204 = vmatpush.bf16.msra.mxu0 %v950
        %1205 = vmatpush.bf16.msra.mxu0 %v946
        %1206 = vmatpush.bf16.msra.mxu0 %v942
        %1207 = vmatmul.bf16.gmra.mxu0 %v579
        %v1208 = vpop.f32.mrf.mxu0
        %v1209 = vadd.f32 %v1195, %v1208
        %v1210 = vpop.f32.mrf.mxu0
        %v1211 = vadd.f32 %v1197, %v1210
        %1212 = vdwg.mxu0
        %1213 = vmatpush.bf16.msra.mxu0 %v1002
        %1214 = vmatpush.bf16.msra.mxu0 %v998
        %1215 = vmatpush.bf16.msra.mxu0 %v994
        %1216 = vmatpush.bf16.msra.mxu0 %v990
        %1217 = vmatpush.bf16.msra.mxu0 %v986
        %1218 = vmatpush.bf16.msra.mxu0 %v982
        %1219 = vmatpush.bf16.msra.mxu0 %v978
        %1220 = vmatpush.bf16.msra.mxu0 %v974
        %1221 = vmatmul.bf16.gmra.mxu0 %v580
        %v1222 = vpop.f32.mrf.mxu0
        %v1223 = vadd.f32 %v1209, %v1222
        %v1224 = vpop.f32.mrf.mxu0
        %v1225 = vadd.f32 %v1211, %v1224
        %1226 = vdwg.mxu0
        %1227 = vmatpush.bf16.msra.mxu0 0
        %1228 = vmatpush.bf16.msra.mxu0 0
        %1229 = vmatpush.bf16.msra.mxu0 0
        %1230 = vmatpush.bf16.msra.mxu0 0
        %1231 = vmatpush.bf16.msra.mxu0 0
        %1232 = vmatpush.bf16.msra.mxu0 %v1014
        %1233 = vmatpush.bf16.msra.mxu0 %v1010
        %1234 = vmatpush.bf16.msra.mxu0 %v1006
        %1235 = vmatmul.bf16.gmra.mxu0 %v1127
        %v1236 = vpop.f32.mrf.mxu0
        %v1237 = vadd.f32 %v1223, %v1236
        %v1238 = vpop.f32.mrf.mxu0
        %v1239 = vadd.f32 %v1225, %v1238
        %1240 = vdwg.mxu0
        %1241 = vmatpush.bf16.msra.mxu0 %v939
        %1242 = vmatpush.bf16.msra.mxu0 %v935
        %1243 = vmatpush.bf16.msra.mxu0 %v931
        %1244 = vmatpush.bf16.msra.mxu0 %v927
        %1245 = vmatpush.bf16.msra.mxu0 %v923
        %1246 = vmatpush.bf16.msra.mxu0 %v919
        %1247 = vmatpush.bf16.msra.mxu0 %v915
        %1248 = vmatpush.bf16.msra.mxu0 %v911
        %1249 = vmatmul.bf16.gmra.mxu0 %v578
        %v1250 = vpop.f32.mrf.mxu0
        %v1251 = vadd.f32 0.0, %v1250
        %v1252 = vpop.f32.mrf.mxu0
        %v1253 = vadd.f32 0.0, %v1252
        %1254 = vdwg.mxu0
        %1255 = vmatpush.bf16.msra.mxu0 %v971
        %1256 = vmatpush.bf16.msra.mxu0 %v967
        %1257 = vmatpush.bf16.msra.mxu0 %v963
        %1258 = vmatpush.bf16.msra.mxu0 %v959
        %1259 = vmatpush.bf16.msra.mxu0 %v955
        %1260 = vmatpush.bf16.msra.mxu0 %v951
        %1261 = vmatpush.bf16.msra.mxu0 %v947
        %1262 = vmatpush.bf16.msra.mxu0 %v943
        %1263 = vmatmul.bf16.gmra.mxu0 %v579
        %v1264 = vpop.f32.mrf.mxu0
        %v1265 = vadd.f32 %v1251, %v1264
        %v1266 = vpop.f32.mrf.mxu0
        %v1267 = vadd.f32 %v1253, %v1266
        %1268 = vdwg.mxu0
        %1269 = vmatpush.bf16.msra.mxu0 %v1003
        %1270 = vmatpush.bf16.msra.mxu0 %v999
        %1271 = vmatpush.bf16.msra.mxu0 %v995
        %1272 = vmatpush.bf16.msra.mxu0 %v991
        %1273 = vmatpush.bf16.msra.mxu0 %v987
        %1274 = vmatpush.bf16.msra.mxu0 %v983
        %1275 = vmatpush.bf16.msra.mxu0 %v979
        %1276 = vmatpush.bf16.msra.mxu0 %v975
        %1277 = vmatmul.bf16.gmra.mxu0 %v580
        %v1278 = vpop.f32.mrf.mxu0
        %v1279 = vadd.f32 %v1265, %v1278
        %v1280 = vpop.f32.mrf.mxu0
        %v1281 = vadd.f32 %v1267, %v1280
        %1282 = vdwg.mxu0
        %1283 = vmatpush.bf16.msra.mxu0 0
        %1284 = vmatpush.bf16.msra.mxu0 0
        %1285 = vmatpush.bf16.msra.mxu0 0
        %1286 = vmatpush.bf16.msra.mxu0 0
        %1287 = vmatpush.bf16.msra.mxu0 0
        %1288 = vmatpush.bf16.msra.mxu0 %v1015
        %1289 = vmatpush.bf16.msra.mxu0 %v1011
        %1290 = vmatpush.bf16.msra.mxu0 %v1007
        %1291 = vmatmul.bf16.gmra.mxu0 %v1127
        %v1292 = vpop.f32.mrf.mxu0
        %v1293 = vadd.f32 %v1279, %v1292
        %v1294 = vpop.f32.mrf.mxu0
        %v1295 = vadd.f32 %v1281, %v1294
        %1296 = vdwg.mxu0
        %1297 = vmatpush.bf16.msra.mxu0 %v940
        %1298 = vmatpush.bf16.msra.mxu0 %v936
        %1299 = vmatpush.bf16.msra.mxu0 %v932
        %1300 = vmatpush.bf16.msra.mxu0 %v928
        %1301 = vmatpush.bf16.msra.mxu0 %v924
        %1302 = vmatpush.bf16.msra.mxu0 %v920
        %1303 = vmatpush.bf16.msra.mxu0 %v916
        %1304 = vmatpush.bf16.msra.mxu0 %v912
        %1305 = vmatmul.bf16.gmra.mxu0 %v578
        %v1306 = vpop.f32.mrf.mxu0
        %v1307 = vadd.f32 0.0, %v1306
        %v1308 = vpop.f32.mrf.mxu0
        %v1309 = vadd.f32 0.0, %v1308
        %1310 = vdwg.mxu0
        %1311 = vmatpush.bf16.msra.mxu0 %v972
        %1312 = vmatpush.bf16.msra.mxu0 %v968
        %1313 = vmatpush.bf16.msra.mxu0 %v964
        %1314 = vmatpush.bf16.msra.mxu0 %v960
        %1315 = vmatpush.bf16.msra.mxu0 %v956
        %1316 = vmatpush.bf16.msra.mxu0 %v952
        %1317 = vmatpush.bf16.msra.mxu0 %v948
        %1318 = vmatpush.bf16.msra.mxu0 %v944
        %1319 = vmatmul.bf16.gmra.mxu0 %v579
        %v1320 = vpop.f32.mrf.mxu0
        %v1321 = vadd.f32 %v1307, %v1320
        %v1322 = vpop.f32.mrf.mxu0
        %v1323 = vadd.f32 %v1309, %v1322
        %1324 = vdwg.mxu0
        %1325 = vmatpush.bf16.msra.mxu0 %v1004
        %1326 = vmatpush.bf16.msra.mxu0 %v1000
        %1327 = vmatpush.bf16.msra.mxu0 %v996
        %1328 = vmatpush.bf16.msra.mxu0 %v992
        %1329 = vmatpush.bf16.msra.mxu0 %v988
        %1330 = vmatpush.bf16.msra.mxu0 %v984
        %1331 = vmatpush.bf16.msra.mxu0 %v980
        %1332 = vmatpush.bf16.msra.mxu0 %v976
        %1333 = vmatmul.bf16.gmra.mxu0 %v580
        %v1334 = vpop.f32.mrf.mxu0
        %v1335 = vadd.f32 %v1321, %v1334
        %v1336 = vpop.f32.mrf.mxu0
        %v1337 = vadd.f32 %v1323, %v1336
        %1338 = vdwg.mxu0
        %1339 = vmatpush.bf16.msra.mxu0 0
        %1340 = vmatpush.bf16.msra.mxu0 0
        %1341 = vmatpush.bf16.msra.mxu0 0
        %1342 = vmatpush.bf16.msra.mxu0 0
        %1343 = vmatpush.bf16.msra.mxu0 0
        %1344 = vmatpush.bf16.msra.mxu0 %v1016
        %1345 = vmatpush.bf16.msra.mxu0 %v1012
        %1346 = vmatpush.bf16.msra.mxu0 %v1008
        %1347 = vmatmul.bf16.gmra.mxu0 %v1127
        %v1348 = vpop.f32.mrf.mxu0
        %v1349 = vadd.f32 %v1335, %v1348
        %v1350 = vpop.f32.mrf.mxu0
        %v1351 = vadd.f32 %v1337, %v1350
        %1352 = vdwg.mxu0
        %1353 = vst [vmem:[%s426] sm:$0xff] %v1181
        %1354 = vst [vmem:[%s426 + $0x8] sm:$0xff] %v1237
        %1355 = vst [vmem:[%s426 + $0x10] sm:$0xff] %v1293
        %1356 = vst [vmem:[%s426 + $0x18] sm:$0xff] %v1349
        %1357 = vst [vmem:[%s426 + $0x20] sm:$0xff] %v1183
        %1358 = vst [vmem:[%s426 + $0x28] sm:$0xff] %v1239
        %1359 = vst [vmem:[%s426 + $0x30] sm:$0xff] %v1295
        %1360 = vst [vmem:[%s426 + $0x38] sm:$0xff] %v1351
        %v1361 = vadd.f32 %v1181, %v1237
        %v1362 = vadd.f32 %v1361, %v1293
        %v1363 = vadd.f32 %v1362, %v1349
        %1364 = vadd.xlane.f32.xlu0 %v1363
        %v1365 = vpop.xlane.xlu0 %1364
        %v1366 = vadd.f32 %v1183, %v1239
        %v1367 = vadd.f32 %v1366, %v1295
        %v1368 = vadd.f32 %v1367, %v1351
        %1369 = vadd.xlane.f32.xlu0 %v1368
        %v1370 = vpop.xlane.xlu0 %1369
        %vm1371 = vcmask 7168
        %1372 = vst.msk [vmem:[%s447] sm:$0xff] %vm1371, %v1365
        %1373 = vst.msk [vmem:[%s447 + $0x8] sm:$0xff] %vm1371, %v1370
        %v1374 = vmul.f32 %v1181, %v1181
        %v1375 = vmul.f32 %v1237, %v1237
        %v1376 = vmul.f32 %v1293, %v1293
        %v1377 = vmul.f32 %v1349, %v1349
        %v1378 = vmul.f32 %v1183, %v1183
        %v1379 = vmul.f32 %v1239, %v1239
        %v1380 = vmul.f32 %v1295, %v1295
        %v1381 = vmul.f32 %v1351, %v1351
        %v1382 = vadd.f32 %v1374, %v1375
        %v1383 = vadd.f32 %v1382, %v1376
        %v1384 = vadd.f32 %v1383, %v1377
        %1385 = vadd.xlane.f32.xlu0 %v1384
        %v1386 = vpop.xlane.xlu0 %1385
        %v1387 = vadd.f32 %v1378, %v1379
        %v1388 = vadd.f32 %v1387, %v1380
        %v1389 = vadd.f32 %v1388, %v1381
        %1390 = vadd.xlane.f32.xlu0 %v1389
        %v1391 = vpop.xlane.xlu0 %1390
        %1392 = vst.msk [vmem:[%s452] sm:$0xff] %vm1371, %v1386
        %1393 = vst.msk [vmem:[%s452 + $0x8] sm:$0xff] %vm1371, %v1391
        %s1394 = sand.u32 %s71, 1
        %s1395 = sand.u32 %s71, 1
        %s1396 = smul.addr %s1395, 64
        %s1397 = scalar_lea.vmem [#allocation3], %s1396
        %p1398 = scmp.lt.s32.totalorder %s16, 1
        %s1399 = scalar_select %p1398, %s16, 1
        %s1400 = smul.addr %s1399, 2
        %s1401 = smul.addr %s1400, 8
        %s1402 = scalar_lea.vmem %s3, %s1401
        %p1403 = scmp.lt.s32.totalorder %s16, 1
        %s1404 = scalar_select %p1403, %s16, 1
        %s1405 = smul.addr %s1404, 2
        %s1406 = smul.addr %s1405, 8
        %s1407 = scalar_lea.vmem %s4, %s1406
        // Predicated region
        $region52: #{basic_block_forward.4} parent=46 // pred_check
          %p1408 = pneg %p81
        $region53: #{basic_block_forward.4} parent=46 // pred_check_branch
          %1410 = sbr.rel (%p1408) target = $region55
        $region54: #{basic_block_forward.4} parent=46 // pred_region
          %s1411 = smul.u32 4, %s16
          %s1412 = smul.addr %s1411, 8
          %s1413 = scalar_lea.vmem %s2, %s1412
          // Predicated region
          $region56: #{basic_block_forward.4} parent=54 // pred_check
            _
          $region57: #{basic_block_forward.4} parent=54 // pred_check_branch
            %1415 = sbr.rel (0) target = $region59
          $region58: #{basic_block_forward.4} parent=54 // pred_region
            // Predicated region
            $region60: #{basic_block_forward.4} parent=58 // pred_check
              _
            $region61: #{basic_block_forward.4} parent=58 // pred_check_branch
              %1417 = sbr.rel (0) target = $region63
            $region62: #{basic_block_forward.4} parent=58 // pred_region
              loop: start=0, step=1, limit=1
              $region64: #{basic_block_forward.4} parent=62 // loop_pre_header
                _
              $region65: #{basic_block_forward.4} parent=62 // loop_header
                %s1419 = sphi 0, %s1423
                %p1420 = scmp.ge.s32.totalorder %s1419, 1
                %s1424 = sphi %s1397, %s1397
                %s1425 = sphi %s1413, %s1413
              $region66: #{basic_block_forward.4} parent=62 // loop_header_branch
                %1422 = sbr.rel (%p1420) target = $region70
              $region67: #{basic_block_forward.4} parent=62 // loop_body
                %v1426 = vld [vmem:[%s1424] sm:$0xff]
                %1427 = vst [vmem:[%s1425] sm:$0xff] %v1426
                %v1428 = vld [vmem:[%s1424 + $0x8] sm:$0xff]
                %1429 = vst [vmem:[%s1425 + $0x8] sm:$0xff] %v1428
                %v1430 = vld [vmem:[%s1424 + $0x10] sm:$0xff]
                %1431 = vst [vmem:[%s1425 + $0x10] sm:$0xff] %v1430
                %v1432 = vld [vmem:[%s1424 + $0x18] sm:$0xff]
                %1433 = vst [vmem:[%s1425 + $0x18] sm:$0xff] %v1432
                %v1434 = vld [vmem:[%s1424 + $0x20] sm:$0xff]
                %1435 = vst [vmem:[%s1425 + $0x40] sm:$0xff] %v1434
                %v1436 = vld [vmem:[%s1424 + $0x28] sm:$0xff]
                %1437 = vst [vmem:[%s1425 + $0x48] sm:$0xff] %v1436
                %v1438 = vld [vmem:[%s1424 + $0x30] sm:$0xff]
                %1439 = vst [vmem:[%s1425 + $0x50] sm:$0xff] %v1438
                %v1440 = vld [vmem:[%s1424 + $0x38] sm:$0xff]
                %1441 = vst [vmem:[%s1425 + $0x58] sm:$0xff] %v1440
              $region68: #{basic_block_forward.4} parent=62 // loop_footer
                %s1423 = sadd.s32 1, %s1419
              $region69: #{basic_block_forward.4} parent=62 // loop_footer_branch
                %1418 = sbr.rel target = $region65
              $region70: #{basic_block_forward.4} parent=62 // loop_exit
                _
            $region63: #{basic_block_forward.4} parent=58 // pred_fallthru
              _
            // Predicated region
            $region71: #{basic_block_forward.4} parent=58 // pred_check
              _
            $region72: #{basic_block_forward.4} parent=58 // pred_check_branch
              %1443 = sbr.rel target = $region74
            $region73: #{basic_block_forward.4} parent=58 // pred_region
              _
            $region74: #{basic_block_forward.4} parent=58 // pred_fallthru
              _
          $region59: #{basic_block_forward.4} parent=54 // pred_fallthru
            _
          %1444 = vnop
        $region55: #{basic_block_forward.4} parent=46 // pred_fallthru
          _
        // Predicated region
        $region75: #{basic_block_forward.4} parent=46 // pred_check
          %p1445 = pneg %p107
        $region76: #{basic_block_forward.4} parent=46 // pred_check_branch
          %1447 = sbr.rel (%p1445) target = $region78
        $region77: #{basic_block_forward.4} parent=46 // pred_region
          _
        $region78: #{basic_block_forward.4} parent=46 // pred_fallthru
          _
        // Predicated region
        $region79: #{basic_block_forward.4} parent=46 // pred_check
          %p1448 = pneg %p133
        $region80: #{basic_block_forward.4} parent=46 // pred_check_branch
          %1450 = sbr.rel (%p1448) target = $region82
        $region81: #{basic_block_forward.4} parent=46 // pred_region
          _
        $region82: #{basic_block_forward.4} parent=46 // pred_fallthru
          _
      $region47: #{basic_block_forward.4} parent=5 // pred_fallthru
        _
      %p1451 = scmp.le.s32.totalorder 2, %s11
      // Predicated region
      $region83: #{basic_block_forward.4} parent=5 // pred_check
        %p1452 = pneg %p1451
      $region84: #{basic_block_forward.4} parent=5 // pred_check_branch
        %1454 = sbr.rel (%p1452) target = $region86
      $region85: #{basic_block_forward.4} parent=5 // pred_region
        %s1455 = ssub.s32 %s11, 2
        // Predicated region
        $region87: #{basic_block_forward.4} parent=85 // pred_check
          %p1456 = pneg %p87
        $region88: #{basic_block_forward.4} parent=85 // pred_check_branch
          %1458 = sbr.rel (%p1456) target = $region90
        $region89: #{basic_block_forward.4} parent=85 // pred_region
          %s1459 = sand.u32 %s72, 1
          %s1460 = sand.u32 %s72, 1
          %s1461 = smul.addr %s1460, 64
          %s1462 = scalar_lea.vmem [#allocation3], %s1461
        $region90: #{basic_block_forward.4} parent=85 // pred_fallthru
          _
        // Predicated region
        $region91: #{basic_block_forward.4} parent=85 // pred_check
          %p1463 = pneg %p113
        $region92: #{basic_block_forward.4} parent=85 // pred_check_branch
          %1465 = sbr.rel (%p1463) target = $region94
        $region93: #{basic_block_forward.4} parent=85 // pred_region
          %p1466 = scmp.lt.s32.totalorder %s17, 1
          %s1467 = scalar_select %p1466, %s17, 1
          %s1468 = smul.addr %s1467, 2
          %s1469 = smul.addr %s1468, 8
          %s1470 = scalar_lea.vmem %s3, %s1469
        $region94: #{basic_block_forward.4} parent=85 // pred_fallthru
          _
        // Predicated region
        $region95: #{basic_block_forward.4} parent=85 // pred_check
          %p1471 = pneg %p139
        $region96: #{basic_block_forward.4} parent=85 // pred_check_branch
          %1473 = sbr.rel (%p1471) target = $region98
        $region97: #{basic_block_forward.4} parent=85 // pred_region
          %p1474 = scmp.lt.s32.totalorder %s17, 1
          %s1475 = scalar_select %p1474, %s17, 1
          %s1476 = smul.addr %s1475, 2
          %s1477 = smul.addr %s1476, 8
          %s1478 = scalar_lea.vmem %s4, %s1477
        $region98: #{basic_block_forward.4} parent=85 // pred_fallthru
          _
      $region86: #{basic_block_forward.4} parent=5 // pred_fallthru
        _
    $region6: #{basic_block_forward.4} parent=1 // loop_footer
      %s15 = sadd.s32 1, %s11
    $region7: #{basic_block_forward.4} parent=1 // loop_footer_branch
      %10 = sbr.rel target = $region3
    $region8: #{basic_block_forward.4} parent=1 // loop_exit
      _

// kernel: basic_block_forward.7
$region0: #{basic_block_forward.7}
  #allocation0 [shape = 'u32[]', space=smem, size = 0x4, offset = 0x4, fixed_abs, tag = 'smem constant byte address 0x4 - core index']
  #allocation1 [shape = 'u32[72,128]{1,0:T(1,128)}', space=vmem, size = 0x9000, scoped, tag = 'internal scratch']
  %s0 = inlined_call_operand.vmem [shape: f32[16,1024], index: 0, kind: input, shape index: {}, may-alias: {0,4}]
  %s1 = inlined_call_operand.vmem [shape: f32[16,1], index: 1, kind: input, shape index: {}]
  %s2 = inlined_call_operand.vmem [shape: f32[16,1], index: 2, kind: input, shape index: {}]
  %s3 = inlined_call_operand.vmem [shape: f32[16,1024], index: 3, kind: input, shape index: {}]
  %s4 = inlined_call_operand.vmem [shape: f32[16,1024], index: 4, kind: output, shape index: {}, may-alias: {0,4}]
  %s5 = sld [smem:[#allocation0]]
  $region114: #{basic_block_forward.7} parent=0
    _
  %s7 = ssub.s32 1, %s5
  %s8 = scalar_select 0, %s7, %s5
  $region1: #{basic_block_forward.7} parent=0
    #allocation2 [shape = 'u8[65536]{0}', space=vmem, size = 0x10000, scoped, tag = 'input window, operand 0']
    #allocation3 [shape = 'u8[65536]{0}', space=vmem, size = 0x10000, scoped, tag = 'input window, operand 3']
    #allocation4 [shape = 'u8[65536]{0}', space=vmem, size = 0x10000, scoped, tag = 'output window, operand 0']
    loop: start=0, step=1, limit=4
    $region2: #{basic_block_forward.7} parent=1 // loop_pre_header
      _
    $region3: #{basic_block_forward.7} parent=1 // loop_header
      %s10 = sphi 0, %s14
      %p11 = scmp.ge.s32.totalorder %s10, 4
      %s20 = sphi 0, %s22
      %s23 = sphi 0, %s20
      %s24 = sphi 0, %s23
      %s40 = sphi 0, %s24
      %s44 = sphi 0, %s44
      %s46 = sphi 0, %s44
      %s47 = sphi 0, %s46
      %s61 = sphi 0, %s47
      %s65 = sphi 0, %s65
      %s67 = sphi 0, %s65
      %s68 = sphi 0, %s67
      %s82 = sphi 0, %s68
      %s88 = sphi 0, %s90
      %s91 = sphi 0, %s88
      %s92 = sphi 0, %s91
      %s108 = sphi 0, %s92
      %s114 = sphi 0, %s116
      %s117 = sphi 0, %s114
      %s118 = sphi 0, %s117
      %s134 = sphi 0, %s118
    $region4: #{basic_block_forward.7} parent=1 // loop_header_branch
      %13 = sbr.rel (%p11) target = $region8
    $region5: #{basic_block_forward.7} parent=1 // loop_body
      %s15 = ssub.s32 %s10, 1
      %s16 = ssub.s32 %s10, 2
      %s17 = sadd.s32 %s10, 1
      %s18 = ssub.s32 %s10, %s17
      %p19 = scmp.eq.s32.totalorder %s18, 0
      %s21 = sadd.s32 %s20, 1
      %s22 = scalar_select %p19, %s20, %s21
      %p25 = pneg %p19
      %p26 = scmp.eq.s32.totalorder %s10, 1
      %p27 = por %p25, %p26
      %p28 = scmp.ne.s32.totalorder %s20, %s23
      %p29 = scmp.eq.s32.totalorder %s10, 0
      %p30 = por %p28, %p29
      %p31 = scmp.ne.s32.totalorder %s20, %s23
      %p32 = scmp.eq.s32.totalorder %s15, 1
      %p33 = por %p31, %p32
      %p34 = scmp.ne.s32.totalorder %s23, %s24
      %p35 = scmp.eq.s32.totalorder %s15, 0
      %p36 = por %p34, %p35
      %p37 = scmp.ne.s32.totalorder %s23, %s24
      %p38 = scmp.eq.s32.totalorder %s16, 1
      %p39 = por %p37, %p38
      %p41 = scmp.ne.s32.totalorder %s24, %s40
      %p42 = scmp.eq.s32.totalorder %s16, 0
      %p43 = por %p41, %p42
      %s45 = sadd.s32 %s44, 1
      %p48 = scmp.eq.s32.totalorder %s10, 1
      %p49 = scmp.ne.s32.totalorder %s44, %s46
      %p50 = scmp.eq.s32.totalorder %s10, 0
      %p51 = por %p49, %p50
      %p52 = scmp.ne.s32.totalorder %s44, %s46
      %p53 = scmp.eq.s32.totalorder %s15, 1
      %p54 = por %p52, %p53
      %p55 = scmp.ne.s32.totalorder %s46, %s47
      %p56 = scmp.eq.s32.totalorder %s15, 0
      %p57 = por %p55, %p56
      %p58 = scmp.ne.s32.totalorder %s46, %s47
      %p59 = scmp.eq.s32.totalorder %s16, 1
      %p60 = por %p58, %p59
      %p62 = scmp.ne.s32.totalorder %s47, %s61
      %p63 = scmp.eq.s32.totalorder %s16, 0
      %p64 = por %p62, %p63
      %s66 = sadd.s32 %s65, 1
      %p69 = scmp.eq.s32.totalorder %s10, 1
      %p70 = scmp.ne.s32.totalorder %s65, %s67
      %p71 = scmp.eq.s32.totalorder %s10, 0
      %p72 = por %p70, %p71
      %p73 = scmp.ne.s32.totalorder %s65, %s67
      %p74 = scmp.eq.s32.totalorder %s15, 1
      %p75 = por %p73, %p74
      %p76 = scmp.ne.s32.totalorder %s67, %s68
      %p77 = scmp.eq.s32.totalorder %s15, 0
      %p78 = por %p76, %p77
      %p79 = scmp.ne.s32.totalorder %s67, %s68
      %p80 = scmp.eq.s32.totalorder %s16, 1
      %p81 = por %p79, %p80
      %p83 = scmp.ne.s32.totalorder %s68, %s82
      %p84 = scmp.eq.s32.totalorder %s16, 0
      %p85 = por %p83, %p84
      %s86 = ssub.s32 %s10, %s17
      %p87 = scmp.eq.s32.totalorder %s86, 0
      %s89 = sadd.s32 %s88, 1
      %s90 = scalar_select %p87, %s88, %s89
      %p93 = pneg %p87
      %p94 = scmp.eq.s32.totalorder %s10, 1
      %p95 = por %p93, %p94
      %p96 = scmp.ne.s32.totalorder %s88, %s91
      %p97 = scmp.eq.s32.totalorder %s10, 0
      %p98 = por %p96, %p97
      %p99 = scmp.ne.s32.totalorder %s88, %s91
      %p100 = scmp.eq.s32.totalorder %s15, 1
      %p101 = por %p99, %p100
      %p102 = scmp.ne.s32.totalorder %s91, %s92
      %p103 = scmp.eq.s32.totalorder %s15, 0
      %p104 = por %p102, %p103
      %p105 = scmp.ne.s32.totalorder %s91, %s92
      %p106 = scmp.eq.s32.totalorder %s16, 1
      %p107 = por %p105, %p106
      %p109 = scmp.ne.s32.totalorder %s92, %s108
      %p110 = scmp.eq.s32.totalorder %s16, 0
      %p111 = por %p109, %p110
      %s112 = ssub.s32 %s10, %s17
      %p113 = scmp.eq.s32.totalorder %s112, 0
      %s115 = sadd.s32 %s114, 1
      %s116 = scalar_select %p113, %s114, %s115
      %p119 = pneg %p113
      %p120 = scmp.eq.s32.totalorder %s10, 1
      %p121 = por %p119, %p120
      %p122 = scmp.ne.s32.totalorder %s114, %s117
      %p123 = scmp.eq.s32.totalorder %s10, 0
      %p124 = por %p122, %p123
      %p125 = scmp.ne.s32.totalorder %s114, %s117
      %p126 = scmp.eq.s32.totalorder %s15, 1
      %p127 = por %p125, %p126
      %p128 = scmp.ne.s32.totalorder %s117, %s118
      %p129 = scmp.eq.s32.totalorder %s15, 0
      %p130 = por %p128, %p129
      %p131 = scmp.ne.s32.totalorder %s117, %s118
      %p132 = scmp.eq.s32.totalorder %s16, 1
      %p133 = por %p131, %p132
      %p135 = scmp.ne.s32.totalorder %s118, %s134
      %p136 = scmp.eq.s32.totalorder %s16, 0
      %p137 = por %p135, %p136
      %p138 = scmp.le.s32.totalorder 1, %s10
      %p139 = scmp.lt.s32.totalorder %s10, 3
      %p140 = pnand %p138, %p139
      %p141 = pneg %p140
      // Predicated region
      $region9: #{basic_block_forward.7} parent=5 // pred_check
        _
      $region10: #{basic_block_forward.7} parent=5 // pred_check_branch
        %143 = sbr.rel (%p140) target = $region12
      $region11: #{basic_block_forward.7} parent=5 // pred_region
        %s144 = ssub.s32 %s10, 1
        // Predicated region
        $region13: #{basic_block_forward.7} parent=11 // pred_check
          %p145 = pneg %p57
        $region14: #{basic_block_forward.7} parent=11 // pred_check_branch
          %147 = sbr.rel (%p145) target = $region16
        $region15: #{basic_block_forward.7} parent=11 // pred_region
          _
        $region16: #{basic_block_forward.7} parent=11 // pred_fallthru
          _
        // Predicated region
        $region17: #{basic_block_forward.7} parent=11 // pred_check
          %p148 = pneg %p78
        $region18: #{basic_block_forward.7} parent=11 // pred_check_branch
          %150 = sbr.rel (%p148) target = $region20
        $region19: #{basic_block_forward.7} parent=11 // pred_region
          _
        $region20: #{basic_block_forward.7} parent=11 // pred_fallthru
          _
      $region12: #{basic_block_forward.7} parent=5 // pred_fallthru
        _
      %p151 = scmp.lt.s32.totalorder %s10, 2
      // Predicated region
      $region21: #{basic_block_forward.7} parent=5 // pred_check
        %p152 = pneg %p151
      $region22: #{basic_block_forward.7} parent=5 // pred_check_branch
        %154 = sbr.rel (%p152) target = $region24
      $region23: #{basic_block_forward.7} parent=5 // pred_region
        // Predicated region
        $region25: #{basic_block_forward.7} parent=23 // pred_check
          %p155 = pneg %p30
        $region26: #{basic_block_forward.7} parent=23 // pred_check_branch
          %157 = sbr.rel (%p155) target = $region28
        $region27: #{basic_block_forward.7} parent=23 // pred_region
          %s158 = sand.u32 %s20, 1
          %s159 = sand.u32 %s20, 1
          %s160 = smul.addr %s159, 64
          %s161 = scalar_lea.vmem [#allocation2], %s160
          %s162 = smul.u32 4, %s10
          %s163 = smul.addr %s162, 8
          %s164 = scalar_lea.vmem %s0, %s163
          // Predicated region
          $region29: #{basic_block_forward.7} parent=27 // pred_check
            _
          $region30: #{basic_block_forward.7} parent=27 // pred_check_branch
            %166 = sbr.rel (0) target = $region32
          $region31: #{basic_block_forward.7} parent=27 // pred_region
            // Predicated region
            $region33: #{basic_block_forward.7} parent=31 // pred_check
              _
            $region34: #{basic_block_forward.7} parent=31 // pred_check_branch
              %168 = sbr.rel (0) target = $region36
            $region35: #{basic_block_forward.7} parent=31 // pred_region
              loop: start=0, step=1, limit=1
              $region37: #{basic_block_forward.7} parent=35 // loop_pre_header
                _
              $region38: #{basic_block_forward.7} parent=35 // loop_header
                %s170 = sphi 0, %s174
                %p171 = scmp.ge.s32.totalorder %s170, 1
                %s175 = sphi %s164, %s164
                %s176 = sphi %s161, %s161
              $region39: #{basic_block_forward.7} parent=35 // loop_header_branch
                %173 = sbr.rel (%p171) target = $region43
              $region40: #{basic_block_forward.7} parent=35 // loop_body
                %v177 = vld [vmem:[%s175] sm:$0xff]
                %178 = vst [vmem:[%s176] sm:$0xff] %v177
                %v179 = vld [vmem:[%s175 + $0x8] sm:$0xff]
                %180 = vst [vmem:[%s176 + $0x8] sm:$0xff] %v179
                %v181 = vld [vmem:[%s175 + $0x10] sm:$0xff]
                %182 = vst [vmem:[%s176 + $0x10] sm:$0xff] %v181
                %v183 = vld [vmem:[%s175 + $0x18] sm:$0xff]
                %184 = vst [vmem:[%s176 + $0x18] sm:$0xff] %v183
                %v185 = vld [vmem:[%s175 + $0x40] sm:$0xff]
                %186 = vst [vmem:[%s176 + $0x20] sm:$0xff] %v185
                %v187 = vld [vmem:[%s175 + $0x48] sm:$0xff]
                %188 = vst [vmem:[%s176 + $0x28] sm:$0xff] %v187
                %v189 = vld [vmem:[%s175 + $0x50] sm:$0xff]
                %190 = vst [vmem:[%s176 + $0x30] sm:$0xff] %v189
                %v191 = vld [vmem:[%s175 + $0x58] sm:$0xff]
                %192 = vst [vmem:[%s176 + $0x38] sm:$0xff] %v191
              $region41: #{basic_block_forward.7} parent=35 // loop_footer
                %s174 = sadd.s32 1, %s170
              $region42: #{basic_block_forward.7} parent=35 // loop_footer_branch
                %169 = sbr.rel target = $region38
              $region43: #{basic_block_forward.7} parent=35 // loop_exit
                _
            $region36: #{basic_block_forward.7} parent=31 // pred_fallthru
              _
            // Predicated region
            $region44: #{basic_block_forward.7} parent=31 // pred_check
              _
            $region45: #{basic_block_forward.7} parent=31 // pred_check_branch
              %194 = sbr.rel target = $region47
            $region46: #{basic_block_forward.7} parent=31 // pred_region
              _
            $region47: #{basic_block_forward.7} parent=31 // pred_fallthru
              _
          $region32: #{basic_block_forward.7} parent=27 // pred_fallthru
            _
          %195 = vnop
        $region28: #{basic_block_forward.7} parent=23 // pred_fallthru
          _
        // Predicated region
        $region48: #{basic_block_forward.7} parent=23 // pred_check
          %p196 = pneg %p98
        $region49: #{basic_block_forward.7} parent=23 // pred_check_branch
          %198 = sbr.rel (%p196) target = $region51
        $region50: #{basic_block_forward.7} parent=23 // pred_region
          %s199 = sand.u32 %s88, 1
          %s200 = sand.u32 %s88, 1
          %s201 = smul.addr %s200, 64
          %s202 = scalar_lea.vmem [#allocation3], %s201
          %s203 = smul.u32 4, %s10
          %s204 = smul.addr %s203, 8
          %s205 = scalar_lea.vmem %s3, %s204
          // Predicated region
          $region52: #{basic_block_forward.7} parent=50 // pred_check
            _
          $region53: #{basic_block_forward.7} parent=50 // pred_check_branch
            %207 = sbr.rel (0) target = $region55
          $region54: #{basic_block_forward.7} parent=50 // pred_region
            // Predicated region
            $region56: #{basic_block_forward.7} parent=54 // pred_check
              _
            $region57: #{basic_block_forward.7} parent=54 // pred_check_branch
              %209 = sbr.rel (0) target = $region59
            $region58: #{basic_block_forward.7} parent=54 // pred_region
              loop: start=0, step=1, limit=1
              $region60: #{basic_block_forward.7} parent=58 // loop_pre_header
                _
              $region61: #{basic_block_forward.7} parent=58 // loop_header
                %s211 = sphi 0, %s215
                %p212 = scmp.ge.s32.totalorder %s211, 1
                %s216 = sphi %s205, %s205
                %s217 = sphi %s202, %s202
              $region62: #{basic_block_forward.7} parent=58 // loop_header_branch
                %214 = sbr.rel (%p212) target = $region66
              $region63: #{basic_block_forward.7} parent=58 // loop_body
                %v218 = vld [vmem:[%s216] sm:$0xff]
                %219 = vst [vmem:[%s217] sm:$0xff] %v218
                %v220 = vld [vmem:[%s216 + $0x8] sm:$0xff]
                %221 = vst [vmem:[%s217 + $0x8] sm:$0xff] %v220
                %v222 = vld [vmem:[%s216 + $0x10] sm:$0xff]
                %223 = vst [vmem:[%s217 + $0x10] sm:$0xff] %v222
                %v224 = vld [vmem:[%s216 + $0x18] sm:$0xff]
                %225 = vst [vmem:[%s217 + $0x18] sm:$0xff] %v224
                %v226 = vld [vmem:[%s216 + $0x40] sm:$0xff]
                %227 = vst [vmem:[%s217 + $0x20] sm:$0xff] %v226
                %v228 = vld [vmem:[%s216 + $0x48] sm:$0xff]
                %229 = vst [vmem:[%s217 + $0x28] sm:$0xff] %v228
                %v230 = vld [vmem:[%s216 + $0x50] sm:$0xff]
                %231 = vst [vmem:[%s217 + $0x30] sm:$0xff] %v230
                %v232 = vld [vmem:[%s216 + $0x58] sm:$0xff]
                %233 = vst [vmem:[%s217 + $0x38] sm:$0xff] %v232
              $region64: #{basic_block_forward.7} parent=58 // loop_footer
                %s215 = sadd.s32 1, %s211
              $region65: #{basic_block_forward.7} parent=58 // loop_footer_branch
                %210 = sbr.rel target = $region61
              $region66: #{basic_block_forward.7} parent=58 // loop_exit
                _
            $region59: #{basic_block_forward.7} parent=54 // pred_fallthru
              _
            // Predicated region
            $region67: #{basic_block_forward.7} parent=54 // pred_check
              _
            $region68: #{basic_block_forward.7} parent=54 // pred_check_branch
              %235 = sbr.rel target = $region70
            $region69: #{basic_block_forward.7} parent=54 // pred_region
              _
            $region70: #{basic_block_forward.7} parent=54 // pred_fallthru
              _
          $region55: #{basic_block_forward.7} parent=50 // pred_fallthru
            _
          %236 = vnop
        $region51: #{basic_block_forward.7} parent=23 // pred_fallthru
          _
      $region24: #{basic_block_forward.7} parent=5 // pred_fallthru
        _
      %p237 = scmp.le.s32.totalorder 1, %s10
      %p238 = scmp.lt.s32.totalorder %s10, 3
      %p239 = pnand %p237, %p238
      %p240 = pneg %p239
      // Predicated region
      $region71: #{basic_block_forward.7} parent=5 // pred_check
        _
      $region72: #{basic_block_forward.7} parent=5 // pred_check_branch
        %242 = sbr.rel (%p239) target = $region74
      $region73: #{basic_block_forward.7} parent=5 // pred_region
        %s243 = ssub.s32 %s10, 1
        %s244 = sand.u32 %s23, 1
        %s245 = sand.u32 %s23, 1
        %s246 = smul.addr %s245, 64
        %s247 = scalar_lea.vmem [#allocation2], %s246
        // Predicated region
        $region75: #{basic_block_forward.7} parent=73 // pred_check
          %p248 = pneg %p36
        $region76: #{basic_block_forward.7} parent=73 // pred_check_branch
          %250 = sbr.rel (%p248) target = $region78
        $region77: #{basic_block_forward.7} parent=73 // pred_region
          _
        $region78: #{basic_block_forward.7} parent=73 // pred_fallthru
          _
        %s251 = sand.u32 %s91, 1
        %s252 = sand.u32 %s91, 1
        %s253 = smul.addr %s252, 64
        %s254 = scalar_lea.vmem [#allocation3], %s253
        // Predicated region
        $region79: #{basic_block_forward.7} parent=73 // pred_check
          %p255 = pneg %p104
        $region80: #{basic_block_forward.7} parent=73 // pred_check_branch
          %257 = sbr.rel (%p255) target = $region82
        $region81: #{basic_block_forward.7} parent=73 // pred_region
          _
        $region82: #{basic_block_forward.7} parent=73 // pred_fallthru
          _
        %s258 = sand.u32 %s23, 1
        %s259 = sand.u32 %s23, 1
        %s260 = smul.addr %s259, 64
        %s261 = scalar_lea.vmem [#allocation2], %s260
        %p262 = pneg %p36
        %p263 = pneg %p33
        %p264 = pneg %p57
        %p265 = pneg %p54
        %p266 = pneg %p78
        %p267 = pneg %p75
        %s268 = sand.u32 %s91, 1
        %s269 = sand.u32 %s91, 1
        %s270 = smul.addr %s269, 64
        %s271 = scalar_lea.vmem [#allocation3], %s270
        %p272 = pneg %p104
        %p273 = pneg %p101
        %p274 = pneg %p130
        %p275 = pneg %p127
        %s276 = sand.u32 %s117, 1
        %s277 = sand.u32 %s117, 1
        %s278 = smul.addr %s277, 64
        %s279 = scalar_lea.vmem [#allocation4], %s278
        %s280 = smul.u32 4, %s15
        %s281 = smul.u32 4, %s15
        %s282 = smul.u32 4, %s15
        %v283 = vld [vmem:[%s247] sm:$0xff]
        %v284 = vld [vmem:[%s247 + $0x8] sm:$0xff]
        %v285 = vld [vmem:[%s247 + $0x10] sm:$0xff]
        %v286 = vld [vmem:[%s247 + $0x18] sm:$0xff]
        %v287 = vld [vmem:[%s247 + $0x20] sm:$0xff]
        %v288 = vld [vmem:[%s247 + $0x28] sm:$0xff]
        %v289 = vld [vmem:[%s247 + $0x30] sm:$0xff]
        %v290 = vld [vmem:[%s247 + $0x38] sm:$0xff]
        %v291 = vld [vmem:[%s1] sm:$0xff]
        %v292 = vld [vmem:[%s1 + $0x8] sm:$0xff]
        %294 = vset.pattern.permute.xlu0 0
        %295 = vperm.xlu0 %294, %v291
        %v296 = vpop.permute.xlu0 %295
        %299 = vset.pattern.permute.xlu0 0
        %300 = vperm.xlu0 %299, %v292
        %v301 = vpop.permute.xlu0 %300
        %v303 = vmul.f32 %v283, %v296
        %v304 = vmul.f32 %v284, %v296
        %v305 = vmul.f32 %v285, %v296
        %v306 = vmul.f32 %v286, %v296
        %v307 = vmul.f32 %v287, %v301
        %v308 = vmul.f32 %v288, %v301
        %v309 = vmul.f32 %v289, %v301
        %v310 = vmul.f32 %v290, %v301
        %v311 = vld [vmem:[%s2] sm:$0xff]
        %v312 = vld [vmem:[%s2 + $0x8] sm:$0xff]
        %314 = vset.pattern.permute.xlu0 0
        %315 = vperm.xlu0 %314, %v311
        %v316 = vpop.permute.xlu0 %315
        %319 = vset.pattern.permute.xlu0 0
        %320 = vperm.xlu0 %319, %v312
        %v321 = vpop.permute.xlu0 %320
        %v323 = vadd.f32 %v303, %v316
        %v324 = vadd.f32 %v304, %v316
        %v325 = vadd.f32 %v305, %v316
        %v326 = vadd.f32 %v306, %v316
        %v327 = vadd.f32 %v307, %v321
        %v328 = vadd.f32 %v308, %v321
        %v329 = vadd.f32 %v309, %v321
        %v330 = vadd.f32 %v310, %v321
        %v331 = vld [vmem:[%s254] sm:$0xff]
        %v332 = vld [vmem:[%s254 + $0x8] sm:$0xff]
        %v333 = vld [vmem:[%s254 + $0x10] sm:$0xff]
        %v334 = vld [vmem:[%s254 + $0x18] sm:$0xff]
        %v335 = vld [vmem:[%s254 + $0x20] sm:$0xff]
        %v336 = vld [vmem:[%s254 + $0x28] sm:$0xff]
        %v337 = vld [vmem:[%s254 + $0x30] sm:$0xff]
        %v338 = vld [vmem:[%s254 + $0x38] sm:$0xff]
        %v339 = vadd.f32 %v323, %v331
        %v340 = vadd.f32 %v324, %v332
        %v341 = vadd.f32 %v325, %v333
        %v342 = vadd.f32 %v326, %v334
        %v343 = vadd.f32 %v327, %v335
        %v344 = vadd.f32 %v328, %v336
        %v345 = vadd.f32 %v329, %v337
        %v346 = vadd.f32 %v330, %v338
        %v347 = vmax.f32 %v339, 0.0
        %v348 = vmax.f32 %v340, 0.0
        %v349 = vmax.f32 %v341, 0.0
        %v350 = vmax.f32 %v342, 0.0
        %v351 = vmax.f32 %v343, 0.0
        %v352 = vmax.f32 %v344, 0.0
        %v353 = vmax.f32 %v345, 0.0
        %v354 = vmax.f32 %v346, 0.0
        %355 = vst [vmem:[%s279] sm:$0xff] %v347
        %356 = vst [vmem:[%s279 + $0x8] sm:$0xff] %v348
        %357 = vst [vmem:[%s279 + $0x10] sm:$0xff] %v349
        %358 = vst [vmem:[%s279 + $0x18] sm:$0xff] %v350
        %359 = vst [vmem:[%s279 + $0x20] sm:$0xff] %v351
        %360 = vst [vmem:[%s279 + $0x28] sm:$0xff] %v352
        %361 = vst [vmem:[%s279 + $0x30] sm:$0xff] %v353
        %362 = vst [vmem:[%s279 + $0x38] sm:$0xff] %v354
        %s363 = sand.u32 %s117, 1
        %s364 = sand.u32 %s117, 1
        %s365 = smul.addr %s364, 64
        %s366 = scalar_lea.vmem [#allocation4], %s365
        // Predicated region
        $region83: #{basic_block_forward.7} parent=73 // pred_check
          %p367 = pneg %p127
        $region84: #{basic_block_forward.7} parent=73 // pred_check_branch
          %369 = sbr.rel (%p367) target = $region86
        $region85: #{basic_block_forward.7} parent=73 // pred_region
          %s370 = smul.u32 4, %s15
          %s371 = smul.addr %s370, 8
          %s372 = scalar_lea.vmem %s4, %s371
          // Predicated region
          $region87: #{basic_block_forward.7} parent=85 // pred_check
            _
          $region88: #{basic_block_forward.7} parent=85 // pred_check_branch
            %374 = sbr.rel (0) target = $region90
          $region89: #{basic_block_forward.7} parent=85 // pred_region
            // Predicated region
            $region91: #{basic_block_forward.7} parent=89 // pred_check
              _
            $region92: #{basic_block_forward.7} parent=89 // pred_check_branch
              %376 = sbr.rel (0) target = $region94
            $region93: #{basic_block_forward.7} parent=89 // pred_region
              loop: start=0, step=1, limit=1
              $region95: #{basic_block_forward.7} parent=93 // loop_pre_header
                _
              $region96: #{basic_block_forward.7} parent=93 // loop_header
                %s378 = sphi 0, %s382
                %p379 = scmp.ge.s32.totalorder %s378, 1
                %s383 = sphi %s366, %s366
                %s384 = sphi %s372, %s372
              $region97: #{basic_block_forward.7} parent=93 // loop_header_branch
                %381 = sbr.rel (%p379) target = $region101
              $region98: #{basic_block_forward.7} parent=93 // loop_body
                %v385 = vld [vmem:[%s383] sm:$0xff]
                %386 = vst [vmem:[%s384] sm:$0xff] %v385
                %v387 = vld [vmem:[%s383 + $0x8] sm:$0xff]
                %388 = vst [vmem:[%s384 + $0x8] sm:$0xff] %v387
                %v389 = vld [vmem:[%s383 + $0x10] sm:$0xff]
                %390 = vst [vmem:[%s384 + $0x10] sm:$0xff] %v389
                %v391 = vld [vmem:[%s383 + $0x18] sm:$0xff]
                %392 = vst [vmem:[%s384 + $0x18] sm:$0xff] %v391
                %v393 = vld [vmem:[%s383 + $0x20] sm:$0xff]
                %394 = vst [vmem:[%s384 + $0x40] sm:$0xff] %v393
                %v395 = vld [vmem:[%s383 + $0x28] sm:$0xff]
                %396 = vst [vmem:[%s384 + $0x48] sm:$0xff] %v395
                %v397 = vld [vmem:[%s383 + $0x30] sm:$0xff]
                %398 = vst [vmem:[%s384 + $0x50] sm:$0xff] %v397
                %v399 = vld [vmem:[%s383 + $0x38] sm:$0xff]
                %400 = vst [vmem:[%s384 + $0x58] sm:$0xff] %v399
              $region99: #{basic_block_forward.7} parent=93 // loop_footer
                %s382 = sadd.s32 1, %s378
              $region100: #{basic_block_forward.7} parent=93 // loop_footer_branch
                %377 = sbr.rel target = $region96
              $region101: #{basic_block_forward.7} parent=93 // loop_exit
                _
            $region94: #{basic_block_forward.7} parent=89 // pred_fallthru
              _
            // Predicated region
            $region102: #{basic_block_forward.7} parent=89 // pred_check
              _
            $region103: #{basic_block_forward.7} parent=89 // pred_check_branch
              %402 = sbr.rel target = $region105
            $region104: #{basic_block_forward.7} parent=89 // pred_region
              _
            $region105: #{basic_block_forward.7} parent=89 // pred_fallthru
              _
          $region90: #{basic_block_forward.7} parent=85 // pred_fallthru
            _
          %403 = vnop
        $region86: #{basic_block_forward.7} parent=73 // pred_fallthru
          _
      $region74: #{basic_block_forward.7} parent=5 // pred_fallthru
        _
      %p404 = scmp.le.s32.totalorder 2, %s10
      // Predicated region
      $region106: #{basic_block_forward.7} parent=5 // pred_check
        %p405 = pneg %p404
      $region107: #{basic_block_forward.7} parent=5 // pred_check_branch
        %407 = sbr.rel (%p405) target = $region109
      $region108: #{basic_block_forward.7} parent=5 // pred_region
        %s408 = ssub.s32 %s10, 2
        // Predicated region
        $region110: #{basic_block_forward.7} parent=108 // pred_check
          %p409 = pneg %p133
        $region111: #{basic_block_forward.7} parent=108 // pred_check_branch
          %411 = sbr.rel (%p409) target = $region113
        $region112: #{basic_block_forward.7} parent=108 // pred_region
          %s412 = sand.u32 %s118, 1
          %s413 = sand.u32 %s118, 1
          %s414 = smul.addr %s413, 64
          %s415 = scalar_lea.vmem [#allocation4], %s414
        $region113: #{basic_block_forward.7} parent=108 // pred_fallthru
          _
      $region109: #{basic_block_forward.7} parent=5 // pred_fallthru
        _
    $region6: #{basic_block_forward.7} parent=1 // loop_footer
      %s14 = sadd.s32 1, %s10
    $region7: #{basic_block_forward.7} parent=1 // loop_footer_branch
      %9 = sbr.rel target = $region3
    $region8: #{basic_block_forward.7} parent=1 // loop_exit
      _

</llo_original>
